<compile_context>
chip_gen: v6e
topology: v6e:2x2x1
jax: 0.10.0
libtpu: 0.0.40
codegen_flags: <defaults>
</compile_context>

<pallas_src>
import functools
import math

import jax
import jax.numpy as jnp
from jax.experimental import pallas as pl
from jax.experimental.pallas import tpu as pltpu


# ----------------------------------------------------------------------------
# Kernel 1: batched per-user sequence processing (geo matmul + fc + MHA + mean)
# ----------------------------------------------------------------------------
def _seq_user_kernel(seq_ref, pos_ref, adj_ref,
                     wg_t_ref, bg_ref, win_t_ref, bin_ref, wo_t_ref, bo_ref,
                     out_ref, z_scratch, *, num_heads, approx_recip):
    f32 = jnp.float32
    tb, L, D = seq_ref.shape
    hd = D // num_heads
    cdt = wo_t_ref.dtype                      # matmul-operand dtype (f32 or bf16)

    xs = seq_ref[...]                         # (TB, L, D)
    xp = pos_ref[...]                         # (TB, L, D)
    adj = adj_ref[...]                        # (TB, L, L)

    # geo branch: relu(fc_geo(adj @ seq_embeds)); fc on the flattened (TB*L, D) view
    geo = jnp.einsum("bij,bjd->bid", adj, xs, preferred_element_type=f32)
    geo = geo.reshape(tb * L, D)
    geo = jnp.dot(geo.astype(cdt), wg_t_ref[...],
                  preferred_element_type=f32) + bg_ref[...]
    geo = jnp.maximum(geo, 0.0)

    # total embeddings (elementwise path in f32)
    x = xs.astype(f32).reshape(tb * L, D) + xp.astype(f32).reshape(tb * L, D) + geo

    # in-projection: one (TB*L, D) @ (D, 3D) matmul
    qkv = jnp.dot(x.astype(cdt), win_t_ref[...],
                  preferred_element_type=f32) + bin_ref[...]
    q = qkv[:, :D].reshape(tb, L, D)
    k = qkv[:, D:2 * D].reshape(tb, L, D)
    v = qkv[:, 2 * D:].reshape(tb, L, D)
    scale = 1.0 / math.sqrt(hd)

    # per-head attention, batched over the TB users in one einsum per dot;
    # head outputs go straight into a VMEM slab (no lane-axis concatenate).
    for h in range(num_heads):
        lo = h * hd
        qh = (q[:, :, lo:lo + hd] * scale).astype(cdt)
        kh = k[:, :, lo:lo + hd].astype(cdt)
        vh = v[:, :, lo:lo + hd].astype(cdt)
        s = jnp.einsum("ble,bme->blm", qh, kh, preferred_element_type=f32)  # (TB,L,L)
        s = s - jnp.max(s, axis=-1, keepdims=True)
        p = jnp.exp(s)
        inv = pl.reciprocal(jnp.sum(p, axis=-1, keepdims=True), approx=approx_recip)
        p = p * inv
        zh = jnp.einsum("blm,bme->ble", p.astype(cdt), vh, preferred_element_type=f32)
        z_scratch[:, :, pl.ds(lo, hd)] = zh

    # out-projection: one (TB*L, D) @ (D, D) matmul, then mean over the sequence
    z = z_scratch[...].reshape(tb * L, D)
    y = jnp.dot(z.astype(cdt), wo_t_ref[...],
                preferred_element_type=f32) + bo_ref[...]
    out_ref[...] = jnp.mean(y.reshape(tb, L, D), axis=1).astype(out_ref.dtype)


def seq_user_embeds(seq_embeds, pos_embeds, geo_adjs, params, num_heads, *,
                    compute_dtype=jnp.float32, tb=16, approx_recip=True):
    B, L, D = seq_embeds.shape
    assert tb % 8 == 0, "requested user tile must be a multiple of 8"
    tb = B if B <= tb else tb
    n_blocks = -(-B // tb)
    Bp = n_blocks * tb
    if Bp != B:
        pad = ((0, Bp - B), (0, 0), (0, 0))
        seq_embeds = jnp.pad(seq_embeds, pad)
        pos_embeds = jnp.pad(pos_embeds, pad)
        geo_adjs = jnp.pad(geo_adjs, pad)

    wg_t = params["fc_geo_w"].T.astype(compute_dtype)
    bg = params["fc_geo_b"].reshape(1, D).astype(jnp.float32)
    win_t = params["in_proj_w"].T.astype(compute_dtype)          # (D, 3D)
    b_in = params["in_proj_b"].reshape(1, 3 * D).astype(jnp.float32)
    wo_t = params["out_proj_w"].T.astype(compute_dtype)
    bo = params["out_proj_b"].reshape(1, D).astype(jnp.float32)

    kern = functools.partial(_seq_user_kernel, num_heads=num_heads,
                             approx_recip=approx_recip)
    out = pl.pallas_call(
        kern,
        out_shape=jax.ShapeDtypeStruct((Bp, D), jnp.float32),
        grid=(n_blocks,),
        in_specs=[
            pl.BlockSpec((tb, L, D), lambda b: (b, 0, 0)),   # seq embeds
            pl.BlockSpec((tb, L, D), lambda b: (b, 0, 0)),   # pos embeds
            pl.BlockSpec((tb, L, L), lambda b: (b, 0, 0)),   # geo adjs
            # weights/biases: constant block index => fetched once, kept resident
            pl.BlockSpec((D, D), lambda b: (0, 0)),          # fc_geo W^T
            pl.BlockSpec((1, D), lambda b: (0, 0)),          # fc_geo b
            pl.BlockSpec((D, 3 * D), lambda b: (0, 0)),      # in_proj W^T
            pl.BlockSpec((1, 3 * D), lambda b: (0, 0)),      # in_proj b
            pl.BlockSpec((D, D), lambda b: (0, 0)),          # out_proj W^T
            pl.BlockSpec((1, D), lambda b: (0, 0)),          # out_proj b
        ],
        out_specs=pl.BlockSpec((tb, D), lambda b: (b, 0)),   # lane-dense user slab
        scratch_shapes=[pltpu.VMEM((tb, L, D), jnp.float32)],
        compiler_params=pltpu.CompilerParams(dimension_semantics=("parallel",)),
    )(seq_embeds.astype(compute_dtype), pos_embeds.astype(compute_dtype),
      geo_adjs.astype(compute_dtype), wg_t, bg, win_t, b_in, wo_t, bo)
    return out[:B]


# ----------------------------------------------------------------------------
# Kernel 2: tiled graph light-conv fused with the user-row scatter
#   out = G @ H + G[:, user_idx] @ (users - H[user_idx])
# ----------------------------------------------------------------------------
def _gconv_kernel(g_ref, h_ref, gcols_ref, delta_ref, o_ref, acc_ref):
    k = pl.program_id(2)

    @pl.when(k == 0)
    def _():
        # init accumulator with the fused scatter correction term
        acc_ref[...] = jnp.dot(gcols_ref[...], delta_ref[...],
                               preferred_element_type=jnp.float32)

    acc_ref[...] += jnp.dot(g_ref[...], h_ref[...],
                            preferred_element_type=jnp.float32)

    @pl.when(k == pl.num_programs(2) - 1)
    def _():
        o_ref[...] = acc_ref[...].astype(o_ref.dtype)


def _pick_tile(dim, target, align):
    """Largest align-multiple tile <= target that divides dim (else the full dim)."""
    if dim <= target:
        return dim
    t = (target // align) * align
    while t >= align:
        if dim % t == 0:
            return t
        t -= align
    return dim


def graph_conv(G, H, g_cols, delta, *, compute_dtype=jnp.float32,
               tm=256, tn=512, tk=512):
    Nm, D = H.shape
    Bu = delta.shape[0]
    tm = _pick_tile(Nm, tm, 8)
    tn = _pick_tile(D, tn, 128)
    tk = _pick_tile(Nm, tk, 128)
    grid = (Nm // tm, D // tn, Nm // tk)
    return pl.pallas_call(
        _gconv_kernel,
        out_shape=jax.ShapeDtypeStruct((Nm, D), jnp.float32),
        grid=grid,
        in_specs=[
            pl.BlockSpec((tm, tk), lambda i, j, k: (i, k)),   # G
            pl.BlockSpec((tk, tn), lambda i, j, k: (k, j)),   # H = nodes[:-1]
            pl.BlockSpec((tm, Bu), lambda i, j, k: (i, 0)),   # G[:, user_idx]
            pl.BlockSpec((Bu, tn), lambda i, j, k: (0, j)),   # users - H[user_idx]
        ],
        out_specs=pl.BlockSpec((tm, tn), lambda i, j, k: (i, j)),
        scratch_shapes=[pltpu.VMEM((tm, tn), jnp.float32)],
        compiler_params=pltpu.CompilerParams(
            dimension_semantics=("parallel", "parallel", "arbitrary")),
    )(G.astype(compute_dtype), H.astype(compute_dtype),
      g_cols.astype(compute_dtype), delta.astype(compute_dtype))


# ----------------------------------------------------------------------------
# SpatialTemporalEnhancedLayer / LocalSpatialTemporalGraph forward (Pallas)
# ----------------------------------------------------------------------------
def st_layer_forward(G, nodes_embeds, seqs, masks, geo_adjs, user_idx,
                     params, num_heads, seq_len, *, compute_dtype, tb, approx_recip):
    seq_embeds = nodes_embeds[seqs]                                        # (B, L, D)
    pos_ids = (jnp.arange(1, seq_len + 1, dtype=jnp.int32)[None, :]
               * masks.astype(jnp.int32))                                  # (B, L)
    pos_embeds = params["pos_emb"][pos_ids]                                # (B, L, D)
    users = seq_user_embeds(seq_embeds, pos_embeds, geo_adjs, params, num_heads,
                            compute_dtype=compute_dtype, tb=tb,
                            approx_recip=approx_recip)                     # (B, D)

    # fused scatter + light conv (no full (N, D) scatter copy in HBM):
    #   G @ scatter(nodes[:-1], idx, users) = G @ nodes[:-1] + G[:, idx] @ delta
    delta = users - nodes_embeds[user_idx]                                 # (B, D)
    g_cols = jnp.take(G, user_idx, axis=1)                                 # (N-1, B)
    lconv = graph_conv(G, nodes_embeds[:-1], g_cols, delta,
                       compute_dtype=compute_dtype)                        # (N-1, D)
    return jnp.concatenate([lconv, nodes_embeds[-1:]], axis=0)


def local_st_graph_forward(G, nodes_embeds, seqs, masks, geo_adjs, user_idx,
                           params, num_layers, num_heads, seq_len, *,
                           compute_dtype=jnp.float32, tb=16, approx_recip=True):
    stack = [nodes_embeds]
    for _ in range(num_layers):
        nodes_embeds = st_layer_forward(G, nodes_embeds, seqs, masks, geo_adjs,
                                        user_idx, params, num_heads, seq_len,
                                        compute_dtype=compute_dtype, tb=tb,
                                        approx_recip=approx_recip)
        stack.append(nodes_embeds)
    return jnp.mean(jnp.stack(stack, axis=0), axis=0)


# ----------------------------------------------------------------------------
# Pure-JAX reference (for correctness check)
# ----------------------------------------------------------------------------
def _mha_ref(x, params, num_heads):
    L, D = x.shape
    hd = D // num_heads
    qkv = x @ params["in_proj_w"].T + params["in_proj_b"]
    q, k, v = qkv[:, :D], qkv[:, D:2 * D], qkv[:, 2 * D:]
    outs = []
    for h in range(num_heads):
        qh = q[:, h * hd:(h + 1) * hd] / math.sqrt(hd)
        kh = k[:, h * hd:(h + 1) * hd]
        vh = v[:, h * hd:(h + 1) * hd]
        p = jax.nn.softmax(qh @ kh.T, axis=-1)
        outs.append(p @ vh)
    z = jnp.concatenate(outs, axis=-1)
    return z @ params["out_proj_w"].T + params["out_proj_b"]


def _layer_ref(G, nodes, seqs, masks, adjs, user_idx, params, num_heads, seq_len):
    seq_e = nodes[seqs]
    pos_ids = (jnp.arange(1, seq_len + 1, dtype=jnp.int32)[None, :]
               * masks.astype(jnp.int32))
    pos_e = params["pos_emb"][pos_ids]
    geo = jnp.einsum("bij,bjd->bid", adjs.astype(jnp.float32), seq_e)
    geo = jax.nn.relu(geo @ params["fc_geo_w"].T + params["fc_geo_b"])
    x = seq_e + pos_e + geo
    mha = jnp.stack([_mha_ref(x[b], params, num_heads) for b in range(x.shape[0])])
    users = mha.mean(axis=1)
    nodes = nodes.at[user_idx].set(users)
    nodes = nodes.at[:-1].set(G @ nodes[:-1])
    return nodes


def _model_ref(G, nodes, seqs, masks, adjs, user_idx, params,
               num_layers, num_heads, seq_len):
    stack = [nodes]
    for _ in range(num_layers):
        nodes = _layer_ref(G, nodes, seqs, masks, adjs, user_idx, params,
                           num_heads, seq_len)
        stack.append(nodes)
    return jnp.mean(jnp.stack(stack, axis=0), axis=0)


# ----------------------------------------------------------------------------
# Deterministic parameter init (mirrors init_weights: uniform(-stdv, stdv))
# ----------------------------------------------------------------------------
def init_params(key, seq_len, emb_dim):
    stdv = 1.0 / math.sqrt(emb_dim)
    ks = jax.random.split(key, 7)
    u = lambda k, s: jax.random.uniform(k, s, jnp.float32, -stdv, stdv)
    return {
        "pos_emb": u(ks[0], (seq_len + 1, emb_dim)),
        "fc_geo_w": u(ks[1], (emb_dim, emb_dim)),
        "fc_geo_b": u(ks[2], (emb_dim,)),
        "in_proj_w": u(ks[3], (3 * emb_dim, emb_dim)),
        "in_proj_b": u(ks[4], (3 * emb_dim,)),
        "out_proj_w": u(ks[5], (emb_dim, emb_dim)),
        "out_proj_b": u(ks[6], (emb_dim,)),
        # NOTE: the module's `self.weight` (emb_dim, emb_dim) is unused in forward.
    }


if __name__ == "__main__":
    num_layers = 2
    num_users = 4
    num_pois = 16
    seq_len = 8
    emb_dim = 32
    num_heads = 2
    batch = 2

    N = num_users + num_pois + 1          # last row = padding node

    key = jax.random.PRNGKey(0)
    kp, kn, kg, ks, km, ka = jax.random.split(key, 6)

    params = init_params(kp, seq_len, emb_dim)
    nodes_embeds = jax.random.normal(kn, (N, emb_dim), jnp.float32)
    G = jax.random.uniform(kg, (N - 1, N - 1), jnp.float32) / (N - 1)     # dense "sparse" graph
    batch_users_seqs = jax.random.randint(ks, (batch, seq_len), num_users, N - 1)
    batch_users_seqs_masks = jax.random.bernoulli(km, 0.8, (batch, seq_len)).astype(jnp.int32)
    batch_users_geo_adjs = jax.random.uniform(ka, (batch, seq_len, seq_len), jnp.float32)
    batch_users_indices = jnp.array([0, 2], dtype=jnp.int32)

    ref = _model_ref(G, nodes_embeds, batch_users_seqs, batch_users_seqs_masks,
                     batch_users_geo_adjs, batch_users_indices, params,
                     num_layers, num_heads, seq_len)
    ref = jax.block_until_ready(ref)

    # f32 path (exact softmax normalization) -- strict check vs reference.
    out_f32 = local_st_graph_forward(
        G, nodes_embeds, batch_users_seqs, batch_users_seqs_masks,
        batch_users_geo_adjs, batch_users_indices, params,
        num_layers, num_heads, seq_len,
        compute_dtype=jnp.float32, approx_recip=False)
    out_f32 = jax.block_until_ready(out_f32)
    assert out_f32.shape == (N, emb_dim)
    assert jnp.allclose(out_f32, ref, rtol=1e-4, atol=1e-4), "f32 mismatch vs reference"

    # bf16 matmul-operand path (production config on v6e/v7x) -- loose check.
    out_bf16 = local_st_graph_forward(
        G, nodes_embeds, batch_users_seqs, batch_users_seqs_masks,
        batch_users_geo_adjs, batch_users_indices, params,
        num_layers, num_heads, seq_len,
        compute_dtype=jnp.bfloat16, approx_recip=True)
    out_bf16 = jax.block_until_ready(out_bf16)
    assert out_bf16.shape == (N, emb_dim)
    assert jnp.allclose(out_bf16, ref, rtol=5e-2, atol=5e-2), "bf16 mismatch vs reference"

    print("KERNEL_OK")
</pallas_src>

<mosaic_0001>
module attributes {stable_mosaic.version = 11 : i64} {
  func.func @_seq_user_kernel(%arg0: i32, %arg1: memref<2x8x32xf32, #tpu.memory_space<vmem>>, %arg2: memref<2x8x32xf32, #tpu.memory_space<vmem>>, %arg3: memref<2x8x8xf32, #tpu.memory_space<vmem>>, %arg4: memref<32x32xf32, #tpu.memory_space<vmem>>, %arg5: memref<1x32xf32, #tpu.memory_space<vmem>>, %arg6: memref<32x96xf32, #tpu.memory_space<vmem>>, %arg7: memref<1x96xf32, #tpu.memory_space<vmem>>, %arg8: memref<32x32xf32, #tpu.memory_space<vmem>>, %arg9: memref<1x32xf32, #tpu.memory_space<vmem>>, %arg10: memref<2x32xf32, #tpu.memory_space<vmem>>, %arg11: memref<2x8x32xf32, #tpu.memory_space<vmem>>) attributes {dimension_semantics = [#tpu.dimension_semantics<parallel>], iteration_bounds = array<i64: 1>, scalar_prefetch = 0 : i64, scratch_operands = 1 : i64, tpu.core_type = #tpu.core_type<tc>, window_params = [{transform_indices = @transform_0, window_bounds = array<i64: 2, 8, 32>}, {transform_indices = @transform_1, window_bounds = array<i64: 2, 8, 32>}, {transform_indices = @transform_2, window_bounds = array<i64: 2, 8, 8>}, {pipeline_mode = #tpu.pipeline_mode<synchronous>, transform_indices = @transform_3, window_bounds = array<i64: 32, 32>}, {pipeline_mode = #tpu.pipeline_mode<synchronous>, transform_indices = @transform_4, window_bounds = array<i64: 1, 32>}, {pipeline_mode = #tpu.pipeline_mode<synchronous>, transform_indices = @transform_5, window_bounds = array<i64: 32, 96>}, {pipeline_mode = #tpu.pipeline_mode<synchronous>, transform_indices = @transform_6, window_bounds = array<i64: 1, 96>}, {pipeline_mode = #tpu.pipeline_mode<synchronous>, transform_indices = @transform_7, window_bounds = array<i64: 32, 32>}, {pipeline_mode = #tpu.pipeline_mode<synchronous>, transform_indices = @transform_8, window_bounds = array<i64: 1, 32>}, {transform_indices = @transform_9, window_bounds = array<i64: 2, 32>}]} {
    %c0 = arith.constant 0 : index
    %c0_0 = arith.constant 0 : index
    %c0_1 = arith.constant 0 : index
    %0 = vector.load %arg1[%c0, %c0_0, %c0_1] : memref<2x8x32xf32, #tpu.memory_space<vmem>>, vector<2x8x32xf32>
    %c0_2 = arith.constant 0 : index
    %c0_3 = arith.constant 0 : index
    %c0_4 = arith.constant 0 : index
    %1 = vector.load %arg2[%c0_2, %c0_3, %c0_4] : memref<2x8x32xf32, #tpu.memory_space<vmem>>, vector<2x8x32xf32>
    %c0_5 = arith.constant 0 : index
    %c0_6 = arith.constant 0 : index
    %c0_7 = arith.constant 0 : index
    %2 = vector.load %arg3[%c0_5, %c0_6, %c0_7] : memref<2x8x8xf32, #tpu.memory_space<vmem>>, vector<2x8x8xf32>
    "tpu.trace_start"() <{level = 10 : i32, message = "bij,bjd->bid"}> : () -> ()
    %cst = arith.constant dense<0.000000e+00> : vector<2x8x32xf32>
    %3 = tpu.matmul %2, %0, %cst {dimension_numbers = #tpu.dot_dimension_numbers<[2], [1], [1], [2], [0, 0, 0, 1, 1, 2], [0], [0]>} : vector<2x8x8xf32>, vector<2x8x32xf32>, vector<2x8x32xf32> -> vector<2x8x32xf32>
    "tpu.trace_stop"() : () -> ()
    %4 = vector.shape_cast %3 : vector<2x8x32xf32> to vector<16x32xf32>
    %c0_8 = arith.constant 0 : index
    %c0_9 = arith.constant 0 : index
    %5 = vector.load %arg4[%c0_8, %c0_9] : memref<32x32xf32, #tpu.memory_space<vmem>>, vector<32x32xf32>
    %cst_10 = arith.constant dense<0.000000e+00> : vector<16x32xf32>
    %6 = tpu.matmul %4, %5, %cst_10 {dimension_numbers = #tpu.dot_dimension_numbers<[1], [0], [0], [1], [0, 0, 1, 1], [], []>} : vector<16x32xf32>, vector<32x32xf32>, vector<16x32xf32> -> vector<16x32xf32>
    %c0_11 = arith.constant 0 : index
    %c0_12 = arith.constant 0 : index
    %7 = vector.load %arg5[%c0_11, %c0_12] : memref<1x32xf32, #tpu.memory_space<vmem>>, vector<1x32xf32>
    %8 = vector.broadcast %7 : vector<1x32xf32> to vector<16x32xf32>
    %9 = arith.addf %6, %8 : vector<16x32xf32>
    %cst_13 = arith.constant 0.000000e+00 : f32
    %10 = vector.broadcast %cst_13 : f32 to vector<16x32xf32>
    %11 = arith.maximumf %9, %10 : vector<16x32xf32>
    %12 = vector.shape_cast %0 : vector<2x8x32xf32> to vector<16x32xf32>
    %13 = vector.shape_cast %1 : vector<2x8x32xf32> to vector<16x32xf32>
    %14 = arith.addf %12, %13 : vector<16x32xf32>
    %15 = arith.addf %14, %11 : vector<16x32xf32>
    %c0_14 = arith.constant 0 : index
    %c0_15 = arith.constant 0 : index
    %16 = vector.load %arg6[%c0_14, %c0_15] : memref<32x96xf32, #tpu.memory_space<vmem>>, vector<32x96xf32>
    %cst_16 = arith.constant dense<0.000000e+00> : vector<16x96xf32>
    %17 = tpu.matmul %15, %16, %cst_16 {dimension_numbers = #tpu.dot_dimension_numbers<[1], [0], [0], [1], [0, 0, 1, 1], [], []>} : vector<16x32xf32>, vector<32x96xf32>, vector<16x96xf32> -> vector<16x96xf32>
    %c0_17 = arith.constant 0 : index
    %c0_18 = arith.constant 0 : index
    %18 = vector.load %arg7[%c0_17, %c0_18] : memref<1x96xf32, #tpu.memory_space<vmem>>, vector<1x96xf32>
    %19 = vector.broadcast %18 : vector<1x96xf32> to vector<16x96xf32>
    %20 = arith.addf %17, %19 : vector<16x96xf32>
    %21 = vector.extract_strided_slice %20 {offsets = [0, 0], sizes = [16, 32], strides = [1, 1]} : vector<16x96xf32> to vector<16x32xf32>
    %22 = vector.shape_cast %21 : vector<16x32xf32> to vector<2x8x32xf32>
    %23 = vector.extract_strided_slice %20 {offsets = [0, 32], sizes = [16, 32], strides = [1, 1]} : vector<16x96xf32> to vector<16x32xf32>
    %24 = vector.shape_cast %23 : vector<16x32xf32> to vector<2x8x32xf32>
    %25 = vector.extract_strided_slice %20 {offsets = [0, 64], sizes = [16, 32], strides = [1, 1]} : vector<16x96xf32> to vector<16x32xf32>
    %26 = vector.shape_cast %25 : vector<16x32xf32> to vector<2x8x32xf32>
    %27 = vector.extract_strided_slice %22 {offsets = [0, 0, 0], sizes = [2, 8, 16], strides = [1, 1, 1]} : vector<2x8x32xf32> to vector<2x8x16xf32>
    %cst_19 = arith.constant 2.500000e-01 : f32
    %28 = vector.broadcast %cst_19 : f32 to vector<2x8x16xf32>
    %29 = arith.mulf %27, %28 : vector<2x8x16xf32>
    %30 = vector.extract_strided_slice %24 {offsets = [0, 0, 0], sizes = [2, 8, 16], strides = [1, 1, 1]} : vector<2x8x32xf32> to vector<2x8x16xf32>
    %31 = vector.extract_strided_slice %26 {offsets = [0, 0, 0], sizes = [2, 8, 16], strides = [1, 1, 1]} : vector<2x8x32xf32> to vector<2x8x16xf32>
    "tpu.trace_start"() <{level = 10 : i32, message = "ble,bme->blm"}> : () -> ()
    %cst_20 = arith.constant dense<0.000000e+00> : vector<2x8x8xf32>
    %32 = tpu.matmul %29, %30, %cst_20 {dimension_numbers = #tpu.dot_dimension_numbers<[2], [2], [1], [1], [0, 0, 0, 1, 1, 1], [0], [0]>} : vector<2x8x16xf32>, vector<2x8x16xf32>, vector<2x8x8xf32> -> vector<2x8x8xf32>
    "tpu.trace_stop"() : () -> ()
    %cst_21 = arith.constant dense<0xFF800000> : vector<2x8xf32>
    %33 = vector.multi_reduction <maximumf>, %32, %cst_21 [2] : vector<2x8x8xf32> to vector<2x8xf32>
    %34 = vector.shape_cast %33 : vector<2x8xf32> to vector<2x8x1xf32>
    %35 = vector.broadcast %34 : vector<2x8x1xf32> to vector<2x8x8xf32>
    %36 = arith.subf %32, %35 : vector<2x8x8xf32>
    %37 = math.exp %36 : vector<2x8x8xf32>
    %cst_22 = arith.constant dense<0.000000e+00> : vector<2x8xf32>
    %38 = vector.multi_reduction <add>, %37, %cst_22 [2] : vector<2x8x8xf32> to vector<2x8xf32>
    %39 = vector.shape_cast %38 : vector<2x8xf32> to vector<2x8x1xf32>
    %40 = tpu.reciprocal %39 : vector<2x8x1xf32> -> vector<2x8x1xf32>
    %41 = vector.broadcast %40 : vector<2x8x1xf32> to vector<2x8x8xf32>
    %42 = arith.mulf %37, %41 : vector<2x8x8xf32>
    "tpu.trace_start"() <{level = 10 : i32, message = "blm,bme->ble"}> : () -> ()
    %cst_23 = arith.constant dense<0.000000e+00> : vector<2x8x16xf32>
    %43 = tpu.matmul %42, %31, %cst_23 {dimension_numbers = #tpu.dot_dimension_numbers<[2], [1], [1], [2], [0, 0, 0, 1, 1, 2], [0], [0]>} : vector<2x8x8xf32>, vector<2x8x16xf32>, vector<2x8x16xf32> -> vector<2x8x16xf32>
    "tpu.trace_stop"() : () -> ()
    %c0_24 = arith.constant 0 : index
    %c0_25 = arith.constant 0 : index
    %c0_26 = arith.constant 0 : index
    %44 = vector.load %arg11[%c0_24, %c0_25, %c0_26] : memref<2x8x32xf32, #tpu.memory_space<vmem>>, vector<2x8x16xf32>
    tpu.vector_store %arg11[%c0_24, %c0_25, %c0_26], %43 {strides = array<i32>} : memref<2x8x32xf32, #tpu.memory_space<vmem>>, vector<2x8x16xf32>,
    %45 = vector.extract_strided_slice %22 {offsets = [0, 0, 16], sizes = [2, 8, 16], strides = [1, 1, 1]} : vector<2x8x32xf32> to vector<2x8x16xf32>
    %cst_27 = arith.constant 2.500000e-01 : f32
    %46 = vector.broadcast %cst_27 : f32 to vector<2x8x16xf32>
    %47 = arith.mulf %45, %46 : vector<2x8x16xf32>
    %48 = vector.extract_strided_slice %24 {offsets = [0, 0, 16], sizes = [2, 8, 16], strides = [1, 1, 1]} : vector<2x8x32xf32> to vector<2x8x16xf32>
    %49 = vector.extract_strided_slice %26 {offsets = [0, 0, 16], sizes = [2, 8, 16], strides = [1, 1, 1]} : vector<2x8x32xf32> to vector<2x8x16xf32>
    "tpu.trace_start"() <{level = 10 : i32, message = "ble,bme->blm"}> : () -> ()
    %cst_28 = arith.constant dense<0.000000e+00> : vector<2x8x8xf32>
    %50 = tpu.matmul %47, %48, %cst_28 {dimension_numbers = #tpu.dot_dimension_numbers<[2], [2], [1], [1], [0, 0, 0, 1, 1, 1], [0], [0]>} : vector<2x8x16xf32>, vector<2x8x16xf32>, vector<2x8x8xf32> -> vector<2x8x8xf32>
    "tpu.trace_stop"() : () -> ()
    %cst_29 = arith.constant dense<0xFF800000> : vector<2x8xf32>
    %51 = vector.multi_reduction <maximumf>, %50, %cst_29 [2] : vector<2x8x8xf32> to vector<2x8xf32>
    %52 = vector.shape_cast %51 : vector<2x8xf32> to vector<2x8x1xf32>
    %53 = vector.broadcast %52 : vector<2x8x1xf32> to vector<2x8x8xf32>
    %54 = arith.subf %50, %53 : vector<2x8x8xf32>
    %55 = math.exp %54 : vector<2x8x8xf32>
    %cst_30 = arith.constant dense<0.000000e+00> : vector<2x8xf32>
    %56 = vector.multi_reduction <add>, %55, %cst_30 [2] : vector<2x8x8xf32> to vector<2x8xf32>
    %57 = vector.shape_cast %56 : vector<2x8xf32> to vector<2x8x1xf32>
    %58 = tpu.reciprocal %57 : vector<2x8x1xf32> -> vector<2x8x1xf32>
    %59 = vector.broadcast %58 : vector<2x8x1xf32> to vector<2x8x8xf32>
    %60 = arith.mulf %55, %59 : vector<2x8x8xf32>
    "tpu.trace_start"() <{level = 10 : i32, message = "blm,bme->ble"}> : () -> ()
    %cst_31 = arith.constant dense<0.000000e+00> : vector<2x8x16xf32>
    %61 = tpu.matmul %60, %49, %cst_31 {dimension_numbers = #tpu.dot_dimension_numbers<[2], [1], [1], [2], [0, 0, 0, 1, 1, 2], [0], [0]>} : vector<2x8x8xf32>, vector<2x8x16xf32>, vector<2x8x16xf32> -> vector<2x8x16xf32>
    "tpu.trace_stop"() : () -> ()
    %c0_32 = arith.constant 0 : index
    %c0_33 = arith.constant 0 : index
    %c16 = arith.constant 16 : index
    %62 = vector.load %arg11[%c0_32, %c0_33, %c16] : memref<2x8x32xf32, #tpu.memory_space<vmem>>, vector<2x8x16xf32>
    tpu.vector_store %arg11[%c0_32, %c0_33, %c16], %61 {strides = array<i32>} : memref<2x8x32xf32, #tpu.memory_space<vmem>>, vector<2x8x16xf32>,
    %c0_34 = arith.constant 0 : index
    %c0_35 = arith.constant 0 : index
    %c0_36 = arith.constant 0 : index
    %63 = vector.load %arg11[%c0_34, %c0_35, %c0_36] : memref<2x8x32xf32, #tpu.memory_space<vmem>>, vector<2x8x32xf32>
    %64 = vector.shape_cast %63 : vector<2x8x32xf32> to vector<16x32xf32>
    %c0_37 = arith.constant 0 : index
    %c0_38 = arith.constant 0 : index
    %65 = vector.load %arg8[%c0_37, %c0_38] : memref<32x32xf32, #tpu.memory_space<vmem>>, vector<32x32xf32>
    %cst_39 = arith.constant dense<0.000000e+00> : vector<16x32xf32>
    %66 = tpu.matmul %64, %65, %cst_39 {dimension_numbers = #tpu.dot_dimension_numbers<[1], [0], [0], [1], [0, 0, 1, 1], [], []>} : vector<16x32xf32>, vector<32x32xf32>, vector<16x32xf32> -> vector<16x32xf32>
    %c0_40 = arith.constant 0 : index
    %c0_41 = arith.constant 0 : index
    %67 = vector.load %arg9[%c0_40, %c0_41] : memref<1x32xf32, #tpu.memory_space<vmem>>, vector<1x32xf32>
    %68 = vector.broadcast %67 : vector<1x32xf32> to vector<16x32xf32>
    %69 = arith.addf %66, %68 : vector<16x32xf32>
    %70 = vector.shape_cast %69 : vector<16x32xf32> to vector<2x8x32xf32>
    %cst_42 = arith.constant dense<0.000000e+00> : vector<2x32xf32>
    %71 = vector.multi_reduction <add>, %70, %cst_42 [1] : vector<2x8x32xf32> to vector<2x32xf32>
    %cst_43 = arith.constant 8.000000e+00 : f32
    %72 = vector.broadcast %cst_43 : f32 to vector<2x32xf32>
    %73 = arith.divf %71, %72 : vector<2x32xf32>
    %c0_44 = arith.constant 0 : index
    %c0_45 = arith.constant 0 : index
    %74 = vector.load %arg10[%c0_44, %c0_45] : memref<2x32xf32, #tpu.memory_space<vmem>>, vector<2x32xf32>
    tpu.vector_store %arg10[%c0_44, %c0_45], %73 {strides = array<i32>} : memref<2x32xf32, #tpu.memory_space<vmem>>, vector<2x32xf32>,
    return
  }
  func.func @transform_0(%arg0: i32) -> (i32, i32, i32) {
    %c0_i32 = arith.constant 0 : i32
    %c0_i32_0 = arith.constant 0 : i32
    %c0_i32_1 = arith.constant 0 : i32
    return %arg0, %c0_i32, %c0_i32_0 : i32, i32, i32
  }
  func.func @transform_1(%arg0: i32) -> (i32, i32, i32) {
    %c0_i32 = arith.constant 0 : i32
    %c0_i32_0 = arith.constant 0 : i32
    %c0_i32_1 = arith.constant 0 : i32
    return %arg0, %c0_i32, %c0_i32_0 : i32, i32, i32
  }
  func.func @transform_2(%arg0: i32) -> (i32, i32, i32) {
    %c0_i32 = arith.constant 0 : i32
    %c0_i32_0 = arith.constant 0 : i32
    %c0_i32_1 = arith.constant 0 : i32
    return %arg0, %c0_i32, %c0_i32_0 : i32, i32, i32
  }
  func.func @transform_3(%arg0: i32) -> (i32, i32) {
    %c0_i32 = arith.constant 0 : i32
    %c0_i32_0 = arith.constant 0 : i32
    %c0_i32_1 = arith.constant 0 : i32
    return %c0_i32, %c0_i32_0 : i32, i32
  }
  func.func @transform_4(%arg0: i32) -> (i32, i32) {
    %c0_i32 = arith.constant 0 : i32
    %c0_i32_0 = arith.constant 0 : i32
    %c0_i32_1 = arith.constant 0 : i32
    return %c0_i32, %c0_i32_0 : i32, i32
  }
  func.func @transform_5(%arg0: i32) -> (i32, i32) {
    %c0_i32 = arith.constant 0 : i32
    %c0_i32_0 = arith.constant 0 : i32
    %c0_i32_1 = arith.constant 0 : i32
    return %c0_i32, %c0_i32_0 : i32, i32
  }
  func.func @transform_6(%arg0: i32) -> (i32, i32) {
    %c0_i32 = arith.constant 0 : i32
    %c0_i32_0 = arith.constant 0 : i32
    %c0_i32_1 = arith.constant 0 : i32
    return %c0_i32, %c0_i32_0 : i32, i32
  }
  func.func @transform_7(%arg0: i32) -> (i32, i32) {
    %c0_i32 = arith.constant 0 : i32
    %c0_i32_0 = arith.constant 0 : i32
    %c0_i32_1 = arith.constant 0 : i32
    return %c0_i32, %c0_i32_0 : i32, i32
  }
  func.func @transform_8(%arg0: i32) -> (i32, i32) {
    %c0_i32 = arith.constant 0 : i32
    %c0_i32_0 = arith.constant 0 : i32
    %c0_i32_1 = arith.constant 0 : i32
    return %c0_i32, %c0_i32_0 : i32, i32
  }
  func.func @transform_9(%arg0: i32) -> (i32, i32) {
    %c0_i32 = arith.constant 0 : i32
    %c0_i32_0 = arith.constant 0 : i32
    return %arg0, %c0_i32 : i32, i32
  }
}

</mosaic_0001>

<llo_original>
// kernel: tpu_custom_call.1
$region0: #{tpu_custom_call.1}
  #allocation0 [shape = 'u32[]', space=smem, size = 0x4, offset = 0x4, fixed_abs, tag = 'smem constant byte address 0x4 - core index']
  #allocation1 [shape = 'u32[144,128]{1,0:T(1,128)}', space=vmem, size = 0x12000, scoped, tag = 'internal scratch']
  #allocation2 [shape = 'f32[2,8,32]{2,1,0:T(8,128)}', space=vmem, size = 0x2000, scoped, tag = 'scratch operand']
  %s0 = inlined_call_operand.hbm [shape: f32[2,8,32], index: 0, kind: input, shape index: {}]
  %s1 = inlined_call_operand.hbm [shape: f32[2,8,32], index: 1, kind: input, shape index: {}]
  %s2 = inlined_call_operand.hbm [shape: f32[2,8,8], index: 2, kind: input, shape index: {}]
  %s3 = inlined_call_operand.hbm [shape: f32[32,32], index: 3, kind: input, shape index: {}]
  %s4 = inlined_call_operand.vmem [shape: f32[1,32], index: 4, kind: input, shape index: {}]
  %s5 = inlined_call_operand.hbm [shape: f32[32,96], index: 5, kind: input, shape index: {}]
  %s6 = inlined_call_operand.vmem [shape: f32[1,96], index: 6, kind: input, shape index: {}]
  %s7 = inlined_call_operand.hbm [shape: f32[32,32], index: 7, kind: input, shape index: {}]
  %s8 = inlined_call_operand.vmem [shape: f32[1,32], index: 8, kind: input, shape index: {}]
  %s9 = inlined_call_operand.hbm [shape: f32[2,32], index: 9, kind: output, shape index: {}]
  %s10 = sld [smem:[#allocation0]]
  $region70: #{tpu_custom_call.1} parent=0
    _
  %s12 = ssub.s32 1, %s10
  %s13 = scalar_select 0, %s12, %s10
  $region1: #{tpu_custom_call.1} parent=0
    #allocation3 [shape = 'u8[8192]{0}', space=vmem, size = 0x2000, scoped, tag = 'input window, operand 0, single buffered']
    #allocation4 [shape = 's32[1]{0}', space=sflag, size = 0x4, scoped, tag = 'scoped memory for tpu_custom_call.1']
    #allocation5 [shape = 's32[1]{0}', space=sflag, size = 0x4, scoped, tag = 'scoped memory for tpu_custom_call.1']
    #allocation6 [shape = 'u8[8192]{0}', space=vmem, size = 0x2000, scoped, tag = 'input window, operand 1, single buffered']
    #allocation7 [shape = 's32[1]{0}', space=sflag, size = 0x4, scoped, tag = 'scoped memory for tpu_custom_call.1']
    #allocation8 [shape = 'u8[8192]{0}', space=vmem, size = 0x2000, scoped, tag = 'input window, operand 2, single buffered']
    #allocation9 [shape = 'u8[16384]{0}', space=vmem, size = 0x4000, scoped, tag = 'input window, operand 3, single buffered']
    #allocation10 [shape = 's32[1]{0}', space=sflag, size = 0x4, scoped, tag = 'scoped memory for tpu_custom_call.1']
    #allocation11 [shape = 'u8[16384]{0}', space=vmem, size = 0x4000, scoped, tag = 'input window, operand 5, single buffered']
    #allocation12 [shape = 'u8[16384]{0}', space=vmem, size = 0x4000, scoped, tag = 'input window, operand 7, single buffered']
    #allocation13 [shape = 's32[1]{0}', space=sflag, size = 0x4, scoped, tag = 'scoped memory for tpu_custom_call.1']
    #allocation14 [shape = 'u8[1024]{0}', space=vmem, size = 0x400, scoped, tag = 'output window, operand 0, single buffered']
    %14 = vsyncpa [#allocation4], 0
    %15 = vsyncpa [#allocation7], 0
    %16 = vsyncpa [#allocation10], 0
    %17 = vsyncpa [#allocation13], 0
    %18 = vsyncpa [#allocation5], 0
    // Predicated region
    $region2: #{tpu_custom_call.1} parent=1 // pred_check
      _
    $region3: #{tpu_custom_call.1} parent=1 // pred_check_branch
      %20 = sbr.rel (0) target = $region5
    $region4: #{tpu_custom_call.1} parent=1 // pred_region
      %s22 = ssub.s32 256, 256
      %23 = vsyncadd [#allocation4], %s22
      %s24 = sshll.u32 [#allocation3], 4
      %s25 = int_to_ptr.vmem [resolvable:$true] %s24
      %30 = dma.hbm_to_vmem [thread:$0]  %s0, 256, %s25, [#allocation4], 128, 128, 8
    $region5: #{tpu_custom_call.1} parent=1 // pred_fallthru
      _
    // Predicated region
    $region6: #{tpu_custom_call.1} parent=1 // pred_check
      _
    $region7: #{tpu_custom_call.1} parent=1 // pred_check_branch
      %32 = sbr.rel (0) target = $region9
    $region8: #{tpu_custom_call.1} parent=1 // pred_region
      %s34 = ssub.s32 256, 256
      %35 = vsyncadd [#allocation7], %s34
      %s36 = sshll.u32 [#allocation6], 4
      %s37 = int_to_ptr.vmem [resolvable:$true] %s36
      %42 = dma.hbm_to_vmem [thread:$0]  %s1, 256, %s37, [#allocation7], 128, 128, 8
    $region9: #{tpu_custom_call.1} parent=1 // pred_fallthru
      _
    // Predicated region
    $region10: #{tpu_custom_call.1} parent=1 // pred_check
      _
    $region11: #{tpu_custom_call.1} parent=1 // pred_check_branch
      %44 = sbr.rel (0) target = $region13
    $region12: #{tpu_custom_call.1} parent=1 // pred_region
      %s46 = ssub.s32 256, 256
      %47 = vsyncadd [#allocation7], %s46
      %s48 = sshll.u32 [#allocation8], 4
      %s49 = int_to_ptr.vmem [resolvable:$true] %s48
      %54 = dma.hbm_to_vmem [thread:$0]  %s2, 256, %s49, [#allocation7], 128, 128, 8
    $region13: #{tpu_custom_call.1} parent=1 // pred_fallthru
      _
    // Predicated region
    $region14: #{tpu_custom_call.1} parent=1 // pred_check
      _
    $region15: #{tpu_custom_call.1} parent=1 // pred_check_branch
      %56 = sbr.rel (0) target = $region17
    $region16: #{tpu_custom_call.1} parent=1 // pred_region
      %s58 = ssub.s32 512, 512
      %59 = vsyncadd [#allocation10], %s58
      %s60 = sshll.u32 [#allocation9], 4
      %s61 = int_to_ptr.vmem [resolvable:$true] %s60
      %66 = dma.hbm_to_vmem [thread:$0]  %s3, 512, %s61, [#allocation10], 128, 128, 8
    $region17: #{tpu_custom_call.1} parent=1 // pred_fallthru
      _
    // Predicated region
    $region18: #{tpu_custom_call.1} parent=1 // pred_check
      _
    $region19: #{tpu_custom_call.1} parent=1 // pred_check_branch
      %68 = sbr.rel (0) target = $region21
    $region20: #{tpu_custom_call.1} parent=1 // pred_region
      _
    $region21: #{tpu_custom_call.1} parent=1 // pred_fallthru
      _
    // Predicated region
    $region22: #{tpu_custom_call.1} parent=1 // pred_check
      _
    $region23: #{tpu_custom_call.1} parent=1 // pred_check_branch
      %70 = sbr.rel (0) target = $region25
    $region24: #{tpu_custom_call.1} parent=1 // pred_region
      %s72 = ssub.s32 512, 512
      %73 = vsyncadd [#allocation10], %s72
      %s74 = sshll.u32 [#allocation11], 4
      %s75 = int_to_ptr.vmem [resolvable:$true] %s74
      %80 = dma.hbm_to_vmem [thread:$0]  %s5, 512, %s75, [#allocation10], 128, 128, 8
    $region25: #{tpu_custom_call.1} parent=1 // pred_fallthru
      _
    // Predicated region
    $region26: #{tpu_custom_call.1} parent=1 // pred_check
      _
    $region27: #{tpu_custom_call.1} parent=1 // pred_check_branch
      %82 = sbr.rel (0) target = $region29
    $region28: #{tpu_custom_call.1} parent=1 // pred_region
      _
    $region29: #{tpu_custom_call.1} parent=1 // pred_fallthru
      _
    // Predicated region
    $region30: #{tpu_custom_call.1} parent=1 // pred_check
      _
    $region31: #{tpu_custom_call.1} parent=1 // pred_check_branch
      %84 = sbr.rel (0) target = $region33
    $region32: #{tpu_custom_call.1} parent=1 // pred_region
      %s86 = ssub.s32 512, 512
      %87 = vsyncadd [#allocation13], %s86
      %s88 = sshll.u32 [#allocation12], 4
      %s89 = int_to_ptr.vmem [resolvable:$true] %s88
      %94 = dma.hbm_to_vmem [thread:$0]  %s7, 512, %s89, [#allocation13], 128, 128, 8
    $region33: #{tpu_custom_call.1} parent=1 // pred_fallthru
      _
    // Predicated region
    $region34: #{tpu_custom_call.1} parent=1 // pred_check
      _
    $region35: #{tpu_custom_call.1} parent=1 // pred_check_branch
      %96 = sbr.rel (0) target = $region37
    $region36: #{tpu_custom_call.1} parent=1 // pred_region
      _
    $region37: #{tpu_custom_call.1} parent=1 // pred_fallthru
      _
    // Predicated region
    $region38: #{tpu_custom_call.1} parent=1 // pred_check
      _
    $region39: #{tpu_custom_call.1} parent=1 // pred_check_branch
      %98 = sbr.rel (0) target = $region41
    $region40: #{tpu_custom_call.1} parent=1 // pred_region
      %99 = dma.done [#allocation4], 256
    $region41: #{tpu_custom_call.1} parent=1 // pred_fallthru
      _
    // Predicated region
    $region42: #{tpu_custom_call.1} parent=1 // pred_check
      _
    $region43: #{tpu_custom_call.1} parent=1 // pred_check_branch
      %101 = sbr.rel (0) target = $region45
    $region44: #{tpu_custom_call.1} parent=1 // pred_region
      %102 = dma.done [#allocation7], 256
    $region45: #{tpu_custom_call.1} parent=1 // pred_fallthru
      _
    // Predicated region
    $region46: #{tpu_custom_call.1} parent=1 // pred_check
      _
    $region47: #{tpu_custom_call.1} parent=1 // pred_check_branch
      %104 = sbr.rel (0) target = $region49
    $region48: #{tpu_custom_call.1} parent=1 // pred_region
      %105 = dma.done [#allocation7], 256
    $region49: #{tpu_custom_call.1} parent=1 // pred_fallthru
      _
    // Predicated region
    $region50: #{tpu_custom_call.1} parent=1 // pred_check
      _
    $region51: #{tpu_custom_call.1} parent=1 // pred_check_branch
      %107 = sbr.rel (0) target = $region53
    $region52: #{tpu_custom_call.1} parent=1 // pred_region
      %108 = dma.done [#allocation10], 512
    $region53: #{tpu_custom_call.1} parent=1 // pred_fallthru
      _
    // Predicated region
    $region54: #{tpu_custom_call.1} parent=1 // pred_check
      _
    $region55: #{tpu_custom_call.1} parent=1 // pred_check_branch
      %110 = sbr.rel (0) target = $region57
    $region56: #{tpu_custom_call.1} parent=1 // pred_region
      %111 = dma.done [#allocation10], 512
    $region57: #{tpu_custom_call.1} parent=1 // pred_fallthru
      _
    // Predicated region
    $region58: #{tpu_custom_call.1} parent=1 // pred_check
      _
    $region59: #{tpu_custom_call.1} parent=1 // pred_check_branch
      %113 = sbr.rel (0) target = $region61
    $region60: #{tpu_custom_call.1} parent=1 // pred_region
      %114 = dma.done [#allocation13], 512
    $region61: #{tpu_custom_call.1} parent=1 // pred_fallthru
      _
    %v115 = vld [vmem:[#allocation3] sm:$0xff]
    %v116 = vld [vmem:[#allocation3 + $0x8] sm:$0xff]
    %v117 = vld [vmem:[#allocation6] sm:$0xff]
    %v118 = vld [vmem:[#allocation6 + $0x8] sm:$0xff]
    %v119 = vld [vmem:[#allocation8] sm:$0xff]
    %v120 = vld [vmem:[#allocation8 + $0x8] sm:$0xff]
    %vm121 = vcmask 64512
    %v123 = vsel %vm121, %v119, 0
    %125 = vmatprep.subr.mxu0 0.0
    %126 = vmatpush1.msra.mxu0 0.0
    %127 = vmatprep.subr.mxu0 0.0
    %128 = vmatpush1.msra.mxu0 0.0
    %129 = vmatprep.subr.mxu0 0.0
    %130 = vmatpush1.msra.mxu0 0.0
    %131 = vmatprep.subr.mxu0 0.0
    %132 = vmatpush1.msra.mxu0 0.0
    %133 = vmatprep.subr.mxu0 0.0
    %134 = vmatpush1.msra.mxu0 0.0
    %135 = vmatprep.subr.mxu0 0.0
    %136 = vmatpush1.msra.mxu0 0.0
    %137 = vmatprep.subr.mxu0 0.0
    %138 = vmatpush1.msra.mxu0 0.0
    %139 = vmatprep.subr.mxu0 0.0
    %140 = vmatpush1.msra.mxu0 0.0
    %141 = vmatprep.subr.mxu0 0.0
    %142 = vmatpush1.msra.mxu0 0.0
    %143 = vmatprep.subr.mxu0 0.0
    %144 = vmatpush1.msra.mxu0 0.0
    %145 = vmatprep.subr.mxu0 0.0
    %146 = vmatpush1.msra.mxu0 0.0
    %147 = vmatprep.subr.mxu0 0.0
    %148 = vmatpush1.msra.mxu0 0.0
    %149 = vmatprep.subr.mxu0 0.0
    %150 = vmatpush1.msra.mxu0 0.0
    %151 = vmatprep.subr.mxu0 0.0
    %152 = vmatpush1.msra.mxu0 0.0
    %153 = vmatprep.subr.mxu0 0.0
    %154 = vmatpush1.msra.mxu0 0.0
    %155 = vmatprep.subr.mxu0 0.0
    %156 = vmatpush1.msra.mxu0 %v115
    %157 = vmatprep.subr.mxu0 0.0
    %158 = vmatpush2.msra.mxu0 0.0
    %159 = vmatprep.subr.mxu0 0.0
    %160 = vmatpush2.msra.mxu0 0.0
    %161 = vmatprep.subr.mxu0 0.0
    %162 = vmatpush2.msra.mxu0 0.0
    %163 = vmatprep.subr.mxu0 0.0
    %164 = vmatpush2.msra.mxu0 0.0
    %165 = vmatprep.subr.mxu0 0.0
    %166 = vmatpush2.msra.mxu0 0.0
    %167 = vmatprep.subr.mxu0 0.0
    %168 = vmatpush2.msra.mxu0 0.0
    %169 = vmatprep.subr.mxu0 0.0
    %170 = vmatpush2.msra.mxu0 0.0
    %171 = vmatprep.subr.mxu0 0.0
    %172 = vmatpush2.msra.mxu0 0.0
    %173 = vmatprep.subr.mxu0 0.0
    %174 = vmatpush2.msra.mxu0 0.0
    %175 = vmatprep.subr.mxu0 0.0
    %176 = vmatpush2.msra.mxu0 0.0
    %177 = vmatprep.subr.mxu0 0.0
    %178 = vmatpush2.msra.mxu0 0.0
    %179 = vmatprep.subr.mxu0 0.0
    %180 = vmatpush2.msra.mxu0 0.0
    %181 = vmatprep.subr.mxu0 0.0
    %182 = vmatpush2.msra.mxu0 0.0
    %183 = vmatprep.subr.mxu0 0.0
    %184 = vmatpush2.msra.mxu0 0.0
    %185 = vmatprep.subr.mxu0 0.0
    %186 = vmatpush2.msra.mxu0 0.0
    %187 = vmatprep.subr.mxu0 0.0
    %188 = vmatpush2.msra.mxu0 0.0
    %189 = vmatprep.mubr.f32.mxu0 0.0
    %190 = vmatmul.mubr.f32.gmra.mxu0 %v123
    %v191 = vpop.f32.mrf.mxu0
    %v192 = vadd.f32 0.0, %v191
    %v193 = vpop.f32.mrf.mxu0
    %194 = vdwg.mxu0
    %v196 = vsel %vm121, %v120, 0
    %198 = vmatprep.subr.mxu0 0.0
    %199 = vmatpush1.msra.mxu0 0.0
    %200 = vmatprep.subr.mxu0 0.0
    %201 = vmatpush1.msra.mxu0 0.0
    %202 = vmatprep.subr.mxu0 0.0
    %203 = vmatpush1.msra.mxu0 0.0
    %204 = vmatprep.subr.mxu0 0.0
    %205 = vmatpush1.msra.mxu0 0.0
    %206 = vmatprep.subr.mxu0 0.0
    %207 = vmatpush1.msra.mxu0 0.0
    %208 = vmatprep.subr.mxu0 0.0
    %209 = vmatpush1.msra.mxu0 0.0
    %210 = vmatprep.subr.mxu0 0.0
    %211 = vmatpush1.msra.mxu0 0.0
    %212 = vmatprep.subr.mxu0 0.0
    %213 = vmatpush1.msra.mxu0 0.0
    %214 = vmatprep.subr.mxu0 0.0
    %215 = vmatpush1.msra.mxu0 0.0
    %216 = vmatprep.subr.mxu0 0.0
    %217 = vmatpush1.msra.mxu0 0.0
    %218 = vmatprep.subr.mxu0 0.0
    %219 = vmatpush1.msra.mxu0 0.0
    %220 = vmatprep.subr.mxu0 0.0
    %221 = vmatpush1.msra.mxu0 0.0
    %222 = vmatprep.subr.mxu0 0.0
    %223 = vmatpush1.msra.mxu0 0.0
    %224 = vmatprep.subr.mxu0 0.0
    %225 = vmatpush1.msra.mxu0 0.0
    %226 = vmatprep.subr.mxu0 0.0
    %227 = vmatpush1.msra.mxu0 0.0
    %228 = vmatprep.subr.mxu0 0.0
    %229 = vmatpush1.msra.mxu0 %v116
    %230 = vmatprep.subr.mxu0 0.0
    %231 = vmatpush2.msra.mxu0 0.0
    %232 = vmatprep.subr.mxu0 0.0
    %233 = vmatpush2.msra.mxu0 0.0
    %234 = vmatprep.subr.mxu0 0.0
    %235 = vmatpush2.msra.mxu0 0.0
    %236 = vmatprep.subr.mxu0 0.0
    %237 = vmatpush2.msra.mxu0 0.0
    %238 = vmatprep.subr.mxu0 0.0
    %239 = vmatpush2.msra.mxu0 0.0
    %240 = vmatprep.subr.mxu0 0.0
    %241 = vmatpush2.msra.mxu0 0.0
    %242 = vmatprep.subr.mxu0 0.0
    %243 = vmatpush2.msra.mxu0 0.0
    %244 = vmatprep.subr.mxu0 0.0
    %245 = vmatpush2.msra.mxu0 0.0
    %246 = vmatprep.subr.mxu0 0.0
    %247 = vmatpush2.msra.mxu0 0.0
    %248 = vmatprep.subr.mxu0 0.0
    %249 = vmatpush2.msra.mxu0 0.0
    %250 = vmatprep.subr.mxu0 0.0
    %251 = vmatpush2.msra.mxu0 0.0
    %252 = vmatprep.subr.mxu0 0.0
    %253 = vmatpush2.msra.mxu0 0.0
    %254 = vmatprep.subr.mxu0 0.0
    %255 = vmatpush2.msra.mxu0 0.0
    %256 = vmatprep.subr.mxu0 0.0
    %257 = vmatpush2.msra.mxu0 0.0
    %258 = vmatprep.subr.mxu0 0.0
    %259 = vmatpush2.msra.mxu0 0.0
    %260 = vmatprep.subr.mxu0 0.0
    %261 = vmatpush2.msra.mxu0 0.0
    %262 = vmatprep.mubr.f32.mxu0 0.0
    %263 = vmatmul.mubr.f32.gmra.mxu0 %v196
    %v264 = vpop.f32.mrf.mxu0
    %v265 = vadd.f32 0.0, %v264
    %v266 = vpop.f32.mrf.mxu0
    %267 = vdwg.mxu0
    %v268 = vld [vmem:[#allocation9] sm:$0xff]
    %v269 = vld [vmem:[#allocation9 + $0x8] sm:$0xff]
    %v270 = vld [vmem:[#allocation9 + $0x10] sm:$0xff]
    %v271 = vld [vmem:[#allocation9 + $0x18] sm:$0xff]
    %v272 = vld [vmem:[%s4] sm:$0x1]
    %v274 = vlaneseq
    %v275 = vshrl.u32 %v274, 7
    %v276 = vsub.s32 0, %v275
    %v277 = vrot.slane %v272, %v276
    %vm279 = vcmask 261120
    %v281 = vsel %vm279, %v192, 0
    %v284 = vsel %vm279, %v265, 0
    %286 = vmatprep.subr.mxu0 0.0
    %287 = vmatpush1.msra.mxu0 0.0
    %288 = vmatprep.subr.mxu0 0.0
    %289 = vmatpush1.msra.mxu0 0.0
    %290 = vmatprep.subr.mxu0 0.0
    %291 = vmatpush1.msra.mxu0 0.0
    %292 = vmatprep.subr.mxu0 0.0
    %293 = vmatpush1.msra.mxu0 0.0
    %294 = vmatprep.subr.mxu0 0.0
    %295 = vmatpush1.msra.mxu0 0.0
    %296 = vmatprep.subr.mxu0 0.0
    %297 = vmatpush1.msra.mxu0 0.0
    %298 = vmatprep.subr.mxu0 0.0
    %299 = vmatpush1.msra.mxu0 0.0
    %300 = vmatprep.subr.mxu0 0.0
    %301 = vmatpush1.msra.mxu0 0.0
    %302 = vmatprep.subr.mxu0 0.0
    %303 = vmatpush1.msra.mxu0 0.0
    %304 = vmatprep.subr.mxu0 0.0
    %305 = vmatpush1.msra.mxu0 0.0
    %306 = vmatprep.subr.mxu0 0.0
    %307 = vmatpush1.msra.mxu0 0.0
    %308 = vmatprep.subr.mxu0 0.0
    %309 = vmatpush1.msra.mxu0 0.0
    %310 = vmatprep.subr.mxu0 0.0
    %311 = vmatpush1.msra.mxu0 %v271
    %312 = vmatprep.subr.mxu0 0.0
    %313 = vmatpush1.msra.mxu0 %v270
    %314 = vmatprep.subr.mxu0 0.0
    %315 = vmatpush1.msra.mxu0 %v269
    %316 = vmatprep.subr.mxu0 0.0
    %317 = vmatpush1.msra.mxu0 %v268
    %318 = vmatprep.subr.mxu0 0.0
    %319 = vmatpush2.msra.mxu0 0.0
    %320 = vmatprep.subr.mxu0 0.0
    %321 = vmatpush2.msra.mxu0 0.0
    %322 = vmatprep.subr.mxu0 0.0
    %323 = vmatpush2.msra.mxu0 0.0
    %324 = vmatprep.subr.mxu0 0.0
    %325 = vmatpush2.msra.mxu0 0.0
    %326 = vmatprep.subr.mxu0 0.0
    %327 = vmatpush2.msra.mxu0 0.0
    %328 = vmatprep.subr.mxu0 0.0
    %329 = vmatpush2.msra.mxu0 0.0
    %330 = vmatprep.subr.mxu0 0.0
    %331 = vmatpush2.msra.mxu0 0.0
    %332 = vmatprep.subr.mxu0 0.0
    %333 = vmatpush2.msra.mxu0 0.0
    %334 = vmatprep.subr.mxu0 0.0
    %335 = vmatpush2.msra.mxu0 0.0
    %336 = vmatprep.subr.mxu0 0.0
    %337 = vmatpush2.msra.mxu0 0.0
    %338 = vmatprep.subr.mxu0 0.0
    %339 = vmatpush2.msra.mxu0 0.0
    %340 = vmatprep.subr.mxu0 0.0
    %341 = vmatpush2.msra.mxu0 0.0
    %342 = vmatprep.subr.mxu0 0.0
    %343 = vmatpush2.msra.mxu0 0.0
    %344 = vmatprep.subr.mxu0 0.0
    %345 = vmatpush2.msra.mxu0 0.0
    %346 = vmatprep.subr.mxu0 0.0
    %347 = vmatpush2.msra.mxu0 0.0
    %348 = vmatprep.subr.mxu0 0.0
    %349 = vmatpush2.msra.mxu0 0.0
    %350 = vmatprep.mubr.f32.mxu0 0.0
    %351 = vmatmul.mubr.f32.gmra.mxu0 %v281
    %v352 = vpop.f32.mrf.mxu0
    %v353 = vadd.f32 %v277, %v352
    %v354 = vpop.f32.mrf.mxu0
    %355 = vmatprep.mubr.f32.mxu0 0.0
    %356 = vmatmul.mubr.f32.gmra.mxu0 %v284
    %v357 = vpop.f32.mrf.mxu0
    %v358 = vadd.f32 %v277, %v357
    %v359 = vpop.f32.mrf.mxu0
    %360 = vdwg.mxu0
    %v361 = vmax.f32 %v353, 0.0
    %v362 = vmax.f32 %v358, 0.0
    %v363 = vadd.f32 %v115, %v117
    %v364 = vadd.f32 %v116, %v118
    %v365 = vadd.f32 %v363, %v361
    %v366 = vadd.f32 %v364, %v362
    %v367 = vld [vmem:[#allocation11] sm:$0xff]
    %v368 = vld [vmem:[#allocation11 + $0x8] sm:$0xff]
    %v369 = vld [vmem:[#allocation11 + $0x10] sm:$0xff]
    %v370 = vld [vmem:[#allocation11 + $0x18] sm:$0xff]
    %v371 = vld [vmem:[%s6] sm:$0x1]
    %v373 = vlaneseq
    %v374 = vshrl.u32 %v373, 7
    %v375 = vsub.s32 0, %v374
    %v376 = vrot.slane %v371, %v375
    %v379 = vsel %vm279, %v365, 0
    %v382 = vsel %vm279, %v366, 0
    %384 = vmatprep.subr.mxu0 0.0
    %385 = vmatpush1.msra.mxu0 0.0
    %386 = vmatprep.subr.mxu0 0.0
    %387 = vmatpush1.msra.mxu0 0.0
    %388 = vmatprep.subr.mxu0 0.0
    %389 = vmatpush1.msra.mxu0 0.0
    %390 = vmatprep.subr.mxu0 0.0
    %391 = vmatpush1.msra.mxu0 0.0
    %392 = vmatprep.subr.mxu0 0.0
    %393 = vmatpush1.msra.mxu0 0.0
    %394 = vmatprep.subr.mxu0 0.0
    %395 = vmatpush1.msra.mxu0 0.0
    %396 = vmatprep.subr.mxu0 0.0
    %397 = vmatpush1.msra.mxu0 0.0
    %398 = vmatprep.subr.mxu0 0.0
    %399 = vmatpush1.msra.mxu0 0.0
    %400 = vmatprep.subr.mxu0 0.0
    %401 = vmatpush1.msra.mxu0 0.0
    %402 = vmatprep.subr.mxu0 0.0
    %403 = vmatpush1.msra.mxu0 0.0
    %404 = vmatprep.subr.mxu0 0.0
    %405 = vmatpush1.msra.mxu0 0.0
    %406 = vmatprep.subr.mxu0 0.0
    %407 = vmatpush1.msra.mxu0 0.0
    %408 = vmatprep.subr.mxu0 0.0
    %409 = vmatpush1.msra.mxu0 %v370
    %410 = vmatprep.subr.mxu0 0.0
    %411 = vmatpush1.msra.mxu0 %v369
    %412 = vmatprep.subr.mxu0 0.0
    %413 = vmatpush1.msra.mxu0 %v368
    %414 = vmatprep.subr.mxu0 0.0
    %415 = vmatpush1.msra.mxu0 %v367
    %416 = vmatprep.subr.mxu0 0.0
    %417 = vmatpush2.msra.mxu0 0.0
    %418 = vmatprep.subr.mxu0 0.0
    %419 = vmatpush2.msra.mxu0 0.0
    %420 = vmatprep.subr.mxu0 0.0
    %421 = vmatpush2.msra.mxu0 0.0
    %422 = vmatprep.subr.mxu0 0.0
    %423 = vmatpush2.msra.mxu0 0.0
    %424 = vmatprep.subr.mxu0 0.0
    %425 = vmatpush2.msra.mxu0 0.0
    %426 = vmatprep.subr.mxu0 0.0
    %427 = vmatpush2.msra.mxu0 0.0
    %428 = vmatprep.subr.mxu0 0.0
    %429 = vmatpush2.msra.mxu0 0.0
    %430 = vmatprep.subr.mxu0 0.0
    %431 = vmatpush2.msra.mxu0 0.0
    %432 = vmatprep.subr.mxu0 0.0
    %433 = vmatpush2.msra.mxu0 0.0
    %434 = vmatprep.subr.mxu0 0.0
    %435 = vmatpush2.msra.mxu0 0.0
    %436 = vmatprep.subr.mxu0 0.0
    %437 = vmatpush2.msra.mxu0 0.0
    %438 = vmatprep.subr.mxu0 0.0
    %439 = vmatpush2.msra.mxu0 0.0
    %440 = vmatprep.subr.mxu0 0.0
    %441 = vmatpush2.msra.mxu0 0.0
    %442 = vmatprep.subr.mxu0 0.0
    %443 = vmatpush2.msra.mxu0 0.0
    %444 = vmatprep.subr.mxu0 0.0
    %445 = vmatpush2.msra.mxu0 0.0
    %446 = vmatprep.subr.mxu0 0.0
    %447 = vmatpush2.msra.mxu0 0.0
    %448 = vmatprep.mubr.f32.mxu0 0.0
    %449 = vmatmul.mubr.f32.gmra.mxu0 %v379
    %v450 = vpop.f32.mrf.mxu0
    %v451 = vadd.f32 %v376, %v450
    %v452 = vpop.f32.mrf.mxu0
    %453 = vmatprep.mubr.f32.mxu0 0.0
    %454 = vmatmul.mubr.f32.gmra.mxu0 %v382
    %v455 = vpop.f32.mrf.mxu0
    %v456 = vadd.f32 %v376, %v455
    %v457 = vpop.f32.mrf.mxu0
    %458 = vdwg.mxu0
    %v459 = vmul.f32 %v451, 0.25
    %v460 = vmul.f32 %v456, 0.25
    %462 = vrot.lane.b32.xlu0 %v451, 96
    %v463 = vpop.permute.xlu0 %462
    %vm464 = vcmask 130048
    %v466 = vsel %vm464, %v459, 0
    %v468 = vsel %vm464, %v463, 0
    %470 = vmatprep.subr.mxu0 0.0
    %471 = vmatpush1.xpose.msra.mxu0 0.0
    %472 = vmatprep.subr.mxu0 0.0
    %473 = vmatpush1.xpose.msra.mxu0 0.0
    %474 = vmatprep.subr.mxu0 0.0
    %475 = vmatpush1.xpose.msra.mxu0 0.0
    %476 = vmatprep.subr.mxu0 0.0
    %477 = vmatpush1.xpose.msra.mxu0 0.0
    %478 = vmatprep.subr.mxu0 0.0
    %479 = vmatpush1.xpose.msra.mxu0 0.0
    %480 = vmatprep.subr.mxu0 0.0
    %481 = vmatpush1.xpose.msra.mxu0 0.0
    %482 = vmatprep.subr.mxu0 0.0
    %483 = vmatpush1.xpose.msra.mxu0 0.0
    %484 = vmatprep.subr.mxu0 0.0
    %485 = vmatpush1.xpose.msra.mxu0 0.0
    %486 = vmatprep.subr.mxu0 0.0
    %487 = vmatpush1.xpose.msra.mxu0 0.0
    %488 = vmatprep.subr.mxu0 0.0
    %489 = vmatpush1.xpose.msra.mxu0 0.0
    %490 = vmatprep.subr.mxu0 0.0
    %491 = vmatpush1.xpose.msra.mxu0 0.0
    %492 = vmatprep.subr.mxu0 0.0
    %493 = vmatpush1.xpose.msra.mxu0 0.0
    %494 = vmatprep.subr.mxu0 0.0
    %495 = vmatpush1.xpose.msra.mxu0 0.0
    %496 = vmatprep.subr.mxu0 0.0
    %497 = vmatpush1.xpose.msra.mxu0 0.0
    %498 = vmatprep.subr.mxu0 0.0
    %499 = vmatpush1.xpose.msra.mxu0 0.0
    %500 = vmatprep.subr.mxu0 0.0
    %501 = vmatpush1.xpose.msra.mxu0 %v468
    %502 = vmatprep.subr.mxu0 0.0
    %503 = vmatpush2.xpose.msra.mxu0 0.0
    %504 = vmatprep.subr.mxu0 0.0
    %505 = vmatpush2.xpose.msra.mxu0 0.0
    %506 = vmatprep.subr.mxu0 0.0
    %507 = vmatpush2.xpose.msra.mxu0 0.0
    %508 = vmatprep.subr.mxu0 0.0
    %509 = vmatpush2.xpose.msra.mxu0 0.0
    %510 = vmatprep.subr.mxu0 0.0
    %511 = vmatpush2.xpose.msra.mxu0 0.0
    %512 = vmatprep.subr.mxu0 0.0
    %513 = vmatpush2.xpose.msra.mxu0 0.0
    %514 = vmatprep.subr.mxu0 0.0
    %515 = vmatpush2.xpose.msra.mxu0 0.0
    %516 = vmatprep.subr.mxu0 0.0
    %517 = vmatpush2.xpose.msra.mxu0 0.0
    %518 = vmatprep.subr.mxu0 0.0
    %519 = vmatpush2.xpose.msra.mxu0 0.0
    %520 = vmatprep.subr.mxu0 0.0
    %521 = vmatpush2.xpose.msra.mxu0 0.0
    %522 = vmatprep.subr.mxu0 0.0
    %523 = vmatpush2.xpose.msra.mxu0 0.0
    %524 = vmatprep.subr.mxu0 0.0
    %525 = vmatpush2.xpose.msra.mxu0 0.0
    %526 = vmatprep.subr.mxu0 0.0
    %527 = vmatpush2.xpose.msra.mxu0 0.0
    %528 = vmatprep.subr.mxu0 0.0
    %529 = vmatpush2.xpose.msra.mxu0 0.0
    %530 = vmatprep.subr.mxu0 0.0
    %531 = vmatpush2.xpose.msra.mxu0 0.0
    %532 = vmatprep.subr.mxu0 0.0
    %533 = vmatpush2.xpose.msra.mxu0 0.0
    %534 = vmatprep.mubr.f32.mxu0 0.0
    %535 = vmatmul.mubr.f32.gmra.mxu0 %v466
    %v536 = vpop.f32.mrf.mxu0
    %v537 = vadd.f32 0.0, %v536
    %v538 = vpop.f32.mrf.mxu0
    %539 = vdwg.mxu0
    %541 = vrot.lane.b32.xlu0 %v456, 96
    %v542 = vpop.permute.xlu0 %541
    %v544 = vsel %vm464, %v460, 0
    %v546 = vsel %vm464, %v542, 0
    %548 = vmatprep.subr.mxu0 0.0
    %549 = vmatpush1.xpose.msra.mxu0 0.0
    %550 = vmatprep.subr.mxu0 0.0
    %551 = vmatpush1.xpose.msra.mxu0 0.0
    %552 = vmatprep.subr.mxu0 0.0
    %553 = vmatpush1.xpose.msra.mxu0 0.0
    %554 = vmatprep.subr.mxu0 0.0
    %555 = vmatpush1.xpose.msra.mxu0 0.0
    %556 = vmatprep.subr.mxu0 0.0
    %557 = vmatpush1.xpose.msra.mxu0 0.0
    %558 = vmatprep.subr.mxu0 0.0
    %559 = vmatpush1.xpose.msra.mxu0 0.0
    %560 = vmatprep.subr.mxu0 0.0
    %561 = vmatpush1.xpose.msra.mxu0 0.0
    %562 = vmatprep.subr.mxu0 0.0
    %563 = vmatpush1.xpose.msra.mxu0 0.0
    %564 = vmatprep.subr.mxu0 0.0
    %565 = vmatpush1.xpose.msra.mxu0 0.0
    %566 = vmatprep.subr.mxu0 0.0
    %567 = vmatpush1.xpose.msra.mxu0 0.0
    %568 = vmatprep.subr.mxu0 0.0
    %569 = vmatpush1.xpose.msra.mxu0 0.0
    %570 = vmatprep.subr.mxu0 0.0
    %571 = vmatpush1.xpose.msra.mxu0 0.0
    %572 = vmatprep.subr.mxu0 0.0
    %573 = vmatpush1.xpose.msra.mxu0 0.0
    %574 = vmatprep.subr.mxu0 0.0
    %575 = vmatpush1.xpose.msra.mxu0 0.0
    %576 = vmatprep.subr.mxu0 0.0
    %577 = vmatpush1.xpose.msra.mxu0 0.0
    %578 = vmatprep.subr.mxu0 0.0
    %579 = vmatpush1.xpose.msra.mxu0 %v546
    %580 = vmatprep.subr.mxu0 0.0
    %581 = vmatpush2.xpose.msra.mxu0 0.0
    %582 = vmatprep.subr.mxu0 0.0
    %583 = vmatpush2.xpose.msra.mxu0 0.0
    %584 = vmatprep.subr.mxu0 0.0
    %585 = vmatpush2.xpose.msra.mxu0 0.0
    %586 = vmatprep.subr.mxu0 0.0
    %587 = vmatpush2.xpose.msra.mxu0 0.0
    %588 = vmatprep.subr.mxu0 0.0
    %589 = vmatpush2.xpose.msra.mxu0 0.0
    %590 = vmatprep.subr.mxu0 0.0
    %591 = vmatpush2.xpose.msra.mxu0 0.0
    %592 = vmatprep.subr.mxu0 0.0
    %593 = vmatpush2.xpose.msra.mxu0 0.0
    %594 = vmatprep.subr.mxu0 0.0
    %595 = vmatpush2.xpose.msra.mxu0 0.0
    %596 = vmatprep.subr.mxu0 0.0
    %597 = vmatpush2.xpose.msra.mxu0 0.0
    %598 = vmatprep.subr.mxu0 0.0
    %599 = vmatpush2.xpose.msra.mxu0 0.0
    %600 = vmatprep.subr.mxu0 0.0
    %601 = vmatpush2.xpose.msra.mxu0 0.0
    %602 = vmatprep.subr.mxu0 0.0
    %603 = vmatpush2.xpose.msra.mxu0 0.0
    %604 = vmatprep.subr.mxu0 0.0
    %605 = vmatpush2.xpose.msra.mxu0 0.0
    %606 = vmatprep.subr.mxu0 0.0
    %607 = vmatpush2.xpose.msra.mxu0 0.0
    %608 = vmatprep.subr.mxu0 0.0
    %609 = vmatpush2.xpose.msra.mxu0 0.0
    %610 = vmatprep.subr.mxu0 0.0
    %611 = vmatpush2.xpose.msra.mxu0 0.0
    %612 = vmatprep.mubr.f32.mxu0 0.0
    %613 = vmatmul.mubr.f32.gmra.mxu0 %v544
    %v614 = vpop.f32.mrf.mxu0
    %v615 = vadd.f32 0.0, %v614
    %v616 = vpop.f32.mrf.mxu0
    %617 = vdwg.mxu0
    %v618 = vsel %vm121, %v537, -inf
    %619 = vmax.xlane.f32.xlu0 %v618
    %v620 = vpop.xlane.xlu0 %619
    %v621 = vsel %vm121, %v615, -inf
    %622 = vmax.xlane.f32.xlu0 %v621
    %v623 = vpop.xlane.xlu0 %622
    %v624 = vsub.f32 %v537, %v620
    %v625 = vsub.f32 %v615, %v623
    %v626 = vmul.f32 %v624, 1.442695
    %v627 = vpow.pop %v626
    %v628 = vmul.f32 %v625, 1.442695
    %v629 = vpow.pop %v628
    %v630 = vsel %vm121, %v627, 0.0
    %631 = vadd.xlane.f32.xlu0 %v630
    %v632 = vpop.xlane.xlu0 %631
    %v633 = vsel %vm121, %v629, 0.0
    %634 = vadd.xlane.f32.xlu0 %v633
    %v635 = vpop.xlane.xlu0 %634
    %v636 = vrcp.pop %v632
    %v637 = vrcp.pop %v635
    %v638 = vmul.f32 %v627, %v636
    %v639 = vmul.f32 %v629, %v637
    %640 = vrot.lane.b32.xlu0 %v451, 64
    %v641 = vpop.permute.xlu0 %640
    %v644 = vsel %vm121, %v638, 0
    %646 = vmatprep.subr.mxu0 0.0
    %647 = vmatpush1.msra.mxu0 0.0
    %648 = vmatprep.subr.mxu0 0.0
    %649 = vmatpush1.msra.mxu0 0.0
    %650 = vmatprep.subr.mxu0 0.0
    %651 = vmatpush1.msra.mxu0 0.0
    %652 = vmatprep.subr.mxu0 0.0
    %653 = vmatpush1.msra.mxu0 0.0
    %654 = vmatprep.subr.mxu0 0.0
    %655 = vmatpush1.msra.mxu0 0.0
    %656 = vmatprep.subr.mxu0 0.0
    %657 = vmatpush1.msra.mxu0 0.0
    %658 = vmatprep.subr.mxu0 0.0
    %659 = vmatpush1.msra.mxu0 0.0
    %660 = vmatprep.subr.mxu0 0.0
    %661 = vmatpush1.msra.mxu0 0.0
    %662 = vmatprep.subr.mxu0 0.0
    %663 = vmatpush1.msra.mxu0 0.0
    %664 = vmatprep.subr.mxu0 0.0
    %665 = vmatpush1.msra.mxu0 0.0
    %666 = vmatprep.subr.mxu0 0.0
    %667 = vmatpush1.msra.mxu0 0.0
    %668 = vmatprep.subr.mxu0 0.0
    %669 = vmatpush1.msra.mxu0 0.0
    %670 = vmatprep.subr.mxu0 0.0
    %671 = vmatpush1.msra.mxu0 0.0
    %672 = vmatprep.subr.mxu0 0.0
    %673 = vmatpush1.msra.mxu0 0.0
    %674 = vmatprep.subr.mxu0 0.0
    %675 = vmatpush1.msra.mxu0 0.0
    %676 = vmatprep.subr.mxu0 0.0
    %677 = vmatpush1.msra.mxu0 %v641
    %678 = vmatprep.subr.mxu0 0.0
    %679 = vmatpush2.msra.mxu0 0.0
    %680 = vmatprep.subr.mxu0 0.0
    %681 = vmatpush2.msra.mxu0 0.0
    %682 = vmatprep.subr.mxu0 0.0
    %683 = vmatpush2.msra.mxu0 0.0
    %684 = vmatprep.subr.mxu0 0.0
    %685 = vmatpush2.msra.mxu0 0.0
    %686 = vmatprep.subr.mxu0 0.0
    %687 = vmatpush2.msra.mxu0 0.0
    %688 = vmatprep.subr.mxu0 0.0
    %689 = vmatpush2.msra.mxu0 0.0
    %690 = vmatprep.subr.mxu0 0.0
    %691 = vmatpush2.msra.mxu0 0.0
    %692 = vmatprep.subr.mxu0 0.0
    %693 = vmatpush2.msra.mxu0 0.0
    %694 = vmatprep.subr.mxu0 0.0
    %695 = vmatpush2.msra.mxu0 0.0
    %696 = vmatprep.subr.mxu0 0.0
    %697 = vmatpush2.msra.mxu0 0.0
    %698 = vmatprep.subr.mxu0 0.0
    %699 = vmatpush2.msra.mxu0 0.0
    %700 = vmatprep.subr.mxu0 0.0
    %701 = vmatpush2.msra.mxu0 0.0
    %702 = vmatprep.subr.mxu0 0.0
    %703 = vmatpush2.msra.mxu0 0.0
    %704 = vmatprep.subr.mxu0 0.0
    %705 = vmatpush2.msra.mxu0 0.0
    %706 = vmatprep.subr.mxu0 0.0
    %707 = vmatpush2.msra.mxu0 0.0
    %708 = vmatprep.subr.mxu0 0.0
    %709 = vmatpush2.msra.mxu0 0.0
    %710 = vmatprep.mubr.f32.mxu0 0.0
    %711 = vmatmul.mubr.f32.gmra.mxu0 %v644
    %v712 = vpop.f32.mrf.mxu0
    %v713 = vadd.f32 0.0, %v712
    %v714 = vpop.f32.mrf.mxu0
    %715 = vdwg.mxu0
    %716 = vrot.lane.b32.xlu0 %v456, 64
    %v717 = vpop.permute.xlu0 %716
    %v720 = vsel %vm121, %v639, 0
    %722 = vmatprep.subr.mxu0 0.0
    %723 = vmatpush1.msra.mxu0 0.0
    %724 = vmatprep.subr.mxu0 0.0
    %725 = vmatpush1.msra.mxu0 0.0
    %726 = vmatprep.subr.mxu0 0.0
    %727 = vmatpush1.msra.mxu0 0.0
    %728 = vmatprep.subr.mxu0 0.0
    %729 = vmatpush1.msra.mxu0 0.0
    %730 = vmatprep.subr.mxu0 0.0
    %731 = vmatpush1.msra.mxu0 0.0
    %732 = vmatprep.subr.mxu0 0.0
    %733 = vmatpush1.msra.mxu0 0.0
    %734 = vmatprep.subr.mxu0 0.0
    %735 = vmatpush1.msra.mxu0 0.0
    %736 = vmatprep.subr.mxu0 0.0
    %737 = vmatpush1.msra.mxu0 0.0
    %738 = vmatprep.subr.mxu0 0.0
    %739 = vmatpush1.msra.mxu0 0.0
    %740 = vmatprep.subr.mxu0 0.0
    %741 = vmatpush1.msra.mxu0 0.0
    %742 = vmatprep.subr.mxu0 0.0
    %743 = vmatpush1.msra.mxu0 0.0
    %744 = vmatprep.subr.mxu0 0.0
    %745 = vmatpush1.msra.mxu0 0.0
    %746 = vmatprep.subr.mxu0 0.0
    %747 = vmatpush1.msra.mxu0 0.0
    %748 = vmatprep.subr.mxu0 0.0
    %749 = vmatpush1.msra.mxu0 0.0
    %750 = vmatprep.subr.mxu0 0.0
    %751 = vmatpush1.msra.mxu0 0.0
    %752 = vmatprep.subr.mxu0 0.0
    %753 = vmatpush1.msra.mxu0 %v717
    %754 = vmatprep.subr.mxu0 0.0
    %755 = vmatpush2.msra.mxu0 0.0
    %756 = vmatprep.subr.mxu0 0.0
    %757 = vmatpush2.msra.mxu0 0.0
    %758 = vmatprep.subr.mxu0 0.0
    %759 = vmatpush2.msra.mxu0 0.0
    %760 = vmatprep.subr.mxu0 0.0
    %761 = vmatpush2.msra.mxu0 0.0
    %762 = vmatprep.subr.mxu0 0.0
    %763 = vmatpush2.msra.mxu0 0.0
    %764 = vmatprep.subr.mxu0 0.0
    %765 = vmatpush2.msra.mxu0 0.0
    %766 = vmatprep.subr.mxu0 0.0
    %767 = vmatpush2.msra.mxu0 0.0
    %768 = vmatprep.subr.mxu0 0.0
    %769 = vmatpush2.msra.mxu0 0.0
    %770 = vmatprep.subr.mxu0 0.0
    %771 = vmatpush2.msra.mxu0 0.0
    %772 = vmatprep.subr.mxu0 0.0
    %773 = vmatpush2.msra.mxu0 0.0
    %774 = vmatprep.subr.mxu0 0.0
    %775 = vmatpush2.msra.mxu0 0.0
    %776 = vmatprep.subr.mxu0 0.0
    %777 = vmatpush2.msra.mxu0 0.0
    %778 = vmatprep.subr.mxu0 0.0
    %779 = vmatpush2.msra.mxu0 0.0
    %780 = vmatprep.subr.mxu0 0.0
    %781 = vmatpush2.msra.mxu0 0.0
    %782 = vmatprep.subr.mxu0 0.0
    %783 = vmatpush2.msra.mxu0 0.0
    %784 = vmatprep.subr.mxu0 0.0
    %785 = vmatpush2.msra.mxu0 0.0
    %786 = vmatprep.mubr.f32.mxu0 0.0
    %787 = vmatmul.mubr.f32.gmra.mxu0 %v720
    %v788 = vpop.f32.mrf.mxu0
    %v789 = vadd.f32 0.0, %v788
    %v790 = vpop.f32.mrf.mxu0
    %791 = vdwg.mxu0
    %792 = vst.msk [vmem:[#allocation2] sm:$0xff] %vm464, %v713
    %793 = vst.msk [vmem:[#allocation2 + $0x8] sm:$0xff] %vm464, %v789
    %794 = vrot.lane.b32.xlu0 %v459, 112
    %v795 = vpop.permute.xlu0 %794
    %796 = vrot.lane.b32.xlu0 %v451, 80
    %v797 = vpop.permute.xlu0 %796
    %v798 = vsel %vm464, %v795, 0
    %v800 = vsel %vm464, %v797, 0
    %802 = vmatprep.subr.mxu0 0.0
    %803 = vmatpush1.xpose.msra.mxu0 0.0
    %804 = vmatprep.subr.mxu0 0.0
    %805 = vmatpush1.xpose.msra.mxu0 0.0
    %806 = vmatprep.subr.mxu0 0.0
    %807 = vmatpush1.xpose.msra.mxu0 0.0
    %808 = vmatprep.subr.mxu0 0.0
    %809 = vmatpush1.xpose.msra.mxu0 0.0
    %810 = vmatprep.subr.mxu0 0.0
    %811 = vmatpush1.xpose.msra.mxu0 0.0
    %812 = vmatprep.subr.mxu0 0.0
    %813 = vmatpush1.xpose.msra.mxu0 0.0
    %814 = vmatprep.subr.mxu0 0.0
    %815 = vmatpush1.xpose.msra.mxu0 0.0
    %816 = vmatprep.subr.mxu0 0.0
    %817 = vmatpush1.xpose.msra.mxu0 0.0
    %818 = vmatprep.subr.mxu0 0.0
    %819 = vmatpush1.xpose.msra.mxu0 0.0
    %820 = vmatprep.subr.mxu0 0.0
    %821 = vmatpush1.xpose.msra.mxu0 0.0
    %822 = vmatprep.subr.mxu0 0.0
    %823 = vmatpush1.xpose.msra.mxu0 0.0
    %824 = vmatprep.subr.mxu0 0.0
    %825 = vmatpush1.xpose.msra.mxu0 0.0
    %826 = vmatprep.subr.mxu0 0.0
    %827 = vmatpush1.xpose.msra.mxu0 0.0
    %828 = vmatprep.subr.mxu0 0.0
    %829 = vmatpush1.xpose.msra.mxu0 0.0
    %830 = vmatprep.subr.mxu0 0.0
    %831 = vmatpush1.xpose.msra.mxu0 0.0
    %832 = vmatprep.subr.mxu0 0.0
    %833 = vmatpush1.xpose.msra.mxu0 %v800
    %834 = vmatprep.subr.mxu0 0.0
    %835 = vmatpush2.xpose.msra.mxu0 0.0
    %836 = vmatprep.subr.mxu0 0.0
    %837 = vmatpush2.xpose.msra.mxu0 0.0
    %838 = vmatprep.subr.mxu0 0.0
    %839 = vmatpush2.xpose.msra.mxu0 0.0
    %840 = vmatprep.subr.mxu0 0.0
    %841 = vmatpush2.xpose.msra.mxu0 0.0
    %842 = vmatprep.subr.mxu0 0.0
    %843 = vmatpush2.xpose.msra.mxu0 0.0
    %844 = vmatprep.subr.mxu0 0.0
    %845 = vmatpush2.xpose.msra.mxu0 0.0
    %846 = vmatprep.subr.mxu0 0.0
    %847 = vmatpush2.xpose.msra.mxu0 0.0
    %848 = vmatprep.subr.mxu0 0.0
    %849 = vmatpush2.xpose.msra.mxu0 0.0
    %850 = vmatprep.subr.mxu0 0.0
    %851 = vmatpush2.xpose.msra.mxu0 0.0
    %852 = vmatprep.subr.mxu0 0.0
    %853 = vmatpush2.xpose.msra.mxu0 0.0
    %854 = vmatprep.subr.mxu0 0.0
    %855 = vmatpush2.xpose.msra.mxu0 0.0
    %856 = vmatprep.subr.mxu0 0.0
    %857 = vmatpush2.xpose.msra.mxu0 0.0
    %858 = vmatprep.subr.mxu0 0.0
    %859 = vmatpush2.xpose.msra.mxu0 0.0
    %860 = vmatprep.subr.mxu0 0.0
    %861 = vmatpush2.xpose.msra.mxu0 0.0
    %862 = vmatprep.subr.mxu0 0.0
    %863 = vmatpush2.xpose.msra.mxu0 0.0
    %864 = vmatprep.subr.mxu0 0.0
    %865 = vmatpush2.xpose.msra.mxu0 0.0
    %866 = vmatprep.mubr.f32.mxu0 0.0
    %867 = vmatmul.mubr.f32.gmra.mxu0 %v798
    %v868 = vpop.f32.mrf.mxu0
    %v869 = vadd.f32 0.0, %v868
    %v870 = vpop.f32.mrf.mxu0
    %871 = vdwg.mxu0
    %872 = vrot.lane.b32.xlu0 %v460, 112
    %v873 = vpop.permute.xlu0 %872
    %874 = vrot.lane.b32.xlu0 %v456, 80
    %v875 = vpop.permute.xlu0 %874
    %v876 = vsel %vm464, %v873, 0
    %v878 = vsel %vm464, %v875, 0
    %880 = vmatprep.subr.mxu0 0.0
    %881 = vmatpush1.xpose.msra.mxu0 0.0
    %882 = vmatprep.subr.mxu0 0.0
    %883 = vmatpush1.xpose.msra.mxu0 0.0
    %884 = vmatprep.subr.mxu0 0.0
    %885 = vmatpush1.xpose.msra.mxu0 0.0
    %886 = vmatprep.subr.mxu0 0.0
    %887 = vmatpush1.xpose.msra.mxu0 0.0
    %888 = vmatprep.subr.mxu0 0.0
    %889 = vmatpush1.xpose.msra.mxu0 0.0
    %890 = vmatprep.subr.mxu0 0.0
    %891 = vmatpush1.xpose.msra.mxu0 0.0
    %892 = vmatprep.subr.mxu0 0.0
    %893 = vmatpush1.xpose.msra.mxu0 0.0
    %894 = vmatprep.subr.mxu0 0.0
    %895 = vmatpush1.xpose.msra.mxu0 0.0
    %896 = vmatprep.subr.mxu0 0.0
    %897 = vmatpush1.xpose.msra.mxu0 0.0
    %898 = vmatprep.subr.mxu0 0.0
    %899 = vmatpush1.xpose.msra.mxu0 0.0
    %900 = vmatprep.subr.mxu0 0.0
    %901 = vmatpush1.xpose.msra.mxu0 0.0
    %902 = vmatprep.subr.mxu0 0.0
    %903 = vmatpush1.xpose.msra.mxu0 0.0
    %904 = vmatprep.subr.mxu0 0.0
    %905 = vmatpush1.xpose.msra.mxu0 0.0
    %906 = vmatprep.subr.mxu0 0.0
    %907 = vmatpush1.xpose.msra.mxu0 0.0
    %908 = vmatprep.subr.mxu0 0.0
    %909 = vmatpush1.xpose.msra.mxu0 0.0
    %910 = vmatprep.subr.mxu0 0.0
    %911 = vmatpush1.xpose.msra.mxu0 %v878
    %912 = vmatprep.subr.mxu0 0.0
    %913 = vmatpush2.xpose.msra.mxu0 0.0
    %914 = vmatprep.subr.mxu0 0.0
    %915 = vmatpush2.xpose.msra.mxu0 0.0
    %916 = vmatprep.subr.mxu0 0.0
    %917 = vmatpush2.xpose.msra.mxu0 0.0
    %918 = vmatprep.subr.mxu0 0.0
    %919 = vmatpush2.xpose.msra.mxu0 0.0
    %920 = vmatprep.subr.mxu0 0.0
    %921 = vmatpush2.xpose.msra.mxu0 0.0
    %922 = vmatprep.subr.mxu0 0.0
    %923 = vmatpush2.xpose.msra.mxu0 0.0
    %924 = vmatprep.subr.mxu0 0.0
    %925 = vmatpush2.xpose.msra.mxu0 0.0
    %926 = vmatprep.subr.mxu0 0.0
    %927 = vmatpush2.xpose.msra.mxu0 0.0
    %928 = vmatprep.subr.mxu0 0.0
    %929 = vmatpush2.xpose.msra.mxu0 0.0
    %930 = vmatprep.subr.mxu0 0.0
    %931 = vmatpush2.xpose.msra.mxu0 0.0
    %932 = vmatprep.subr.mxu0 0.0
    %933 = vmatpush2.xpose.msra.mxu0 0.0
    %934 = vmatprep.subr.mxu0 0.0
    %935 = vmatpush2.xpose.msra.mxu0 0.0
    %936 = vmatprep.subr.mxu0 0.0
    %937 = vmatpush2.xpose.msra.mxu0 0.0
    %938 = vmatprep.subr.mxu0 0.0
    %939 = vmatpush2.xpose.msra.mxu0 0.0
    %940 = vmatprep.subr.mxu0 0.0
    %941 = vmatpush2.xpose.msra.mxu0 0.0
    %942 = vmatprep.subr.mxu0 0.0
    %943 = vmatpush2.xpose.msra.mxu0 0.0
    %944 = vmatprep.mubr.f32.mxu0 0.0
    %945 = vmatmul.mubr.f32.gmra.mxu0 %v876
    %v946 = vpop.f32.mrf.mxu0
    %v947 = vadd.f32 0.0, %v946
    %v948 = vpop.f32.mrf.mxu0
    %949 = vdwg.mxu0
    %v950 = vsel %vm121, %v869, -inf
    %951 = vmax.xlane.f32.xlu0 %v950
    %v952 = vpop.xlane.xlu0 %951
    %v953 = vsel %vm121, %v947, -inf
    %954 = vmax.xlane.f32.xlu0 %v953
    %v955 = vpop.xlane.xlu0 %954
    %v956 = vsub.f32 %v869, %v952
    %v957 = vsub.f32 %v947, %v955
    %v958 = vmul.f32 %v956, 1.442695
    %v959 = vpow.pop %v958
    %v960 = vmul.f32 %v957, 1.442695
    %v961 = vpow.pop %v960
    %v962 = vsel %vm121, %v959, 0.0
    %963 = vadd.xlane.f32.xlu0 %v962
    %v964 = vpop.xlane.xlu0 %963
    %v965 = vsel %vm121, %v961, 0.0
    %966 = vadd.xlane.f32.xlu0 %v965
    %v967 = vpop.xlane.xlu0 %966
    %v968 = vrcp.pop %v964
    %v969 = vrcp.pop %v967
    %v970 = vmul.f32 %v959, %v968
    %v971 = vmul.f32 %v961, %v969
    %972 = vrot.lane.b32.xlu0 %v451, 48
    %v973 = vpop.permute.xlu0 %972
    %v976 = vsel %vm121, %v970, 0
    %978 = vmatprep.subr.mxu0 0.0
    %979 = vmatpush1.msra.mxu0 0.0
    %980 = vmatprep.subr.mxu0 0.0
    %981 = vmatpush1.msra.mxu0 0.0
    %982 = vmatprep.subr.mxu0 0.0
    %983 = vmatpush1.msra.mxu0 0.0
    %984 = vmatprep.subr.mxu0 0.0
    %985 = vmatpush1.msra.mxu0 0.0
    %986 = vmatprep.subr.mxu0 0.0
    %987 = vmatpush1.msra.mxu0 0.0
    %988 = vmatprep.subr.mxu0 0.0
    %989 = vmatpush1.msra.mxu0 0.0
    %990 = vmatprep.subr.mxu0 0.0
    %991 = vmatpush1.msra.mxu0 0.0
    %992 = vmatprep.subr.mxu0 0.0
    %993 = vmatpush1.msra.mxu0 0.0
    %994 = vmatprep.subr.mxu0 0.0
    %995 = vmatpush1.msra.mxu0 0.0
    %996 = vmatprep.subr.mxu0 0.0
    %997 = vmatpush1.msra.mxu0 0.0
    %998 = vmatprep.subr.mxu0 0.0
    %999 = vmatpush1.msra.mxu0 0.0
    %1000 = vmatprep.subr.mxu0 0.0
    %1001 = vmatpush1.msra.mxu0 0.0
    %1002 = vmatprep.subr.mxu0 0.0
    %1003 = vmatpush1.msra.mxu0 0.0
    %1004 = vmatprep.subr.mxu0 0.0
    %1005 = vmatpush1.msra.mxu0 0.0
    %1006 = vmatprep.subr.mxu0 0.0
    %1007 = vmatpush1.msra.mxu0 0.0
    %1008 = vmatprep.subr.mxu0 0.0
    %1009 = vmatpush1.msra.mxu0 %v973
    %1010 = vmatprep.subr.mxu0 0.0
    %1011 = vmatpush2.msra.mxu0 0.0
    %1012 = vmatprep.subr.mxu0 0.0
    %1013 = vmatpush2.msra.mxu0 0.0
    %1014 = vmatprep.subr.mxu0 0.0
    %1015 = vmatpush2.msra.mxu0 0.0
    %1016 = vmatprep.subr.mxu0 0.0
    %1017 = vmatpush2.msra.mxu0 0.0
    %1018 = vmatprep.subr.mxu0 0.0
    %1019 = vmatpush2.msra.mxu0 0.0
    %1020 = vmatprep.subr.mxu0 0.0
    %1021 = vmatpush2.msra.mxu0 0.0
    %1022 = vmatprep.subr.mxu0 0.0
    %1023 = vmatpush2.msra.mxu0 0.0
    %1024 = vmatprep.subr.mxu0 0.0
    %1025 = vmatpush2.msra.mxu0 0.0
    %1026 = vmatprep.subr.mxu0 0.0
    %1027 = vmatpush2.msra.mxu0 0.0
    %1028 = vmatprep.subr.mxu0 0.0
    %1029 = vmatpush2.msra.mxu0 0.0
    %1030 = vmatprep.subr.mxu0 0.0
    %1031 = vmatpush2.msra.mxu0 0.0
    %1032 = vmatprep.subr.mxu0 0.0
    %1033 = vmatpush2.msra.mxu0 0.0
    %1034 = vmatprep.subr.mxu0 0.0
    %1035 = vmatpush2.msra.mxu0 0.0
    %1036 = vmatprep.subr.mxu0 0.0
    %1037 = vmatpush2.msra.mxu0 0.0
    %1038 = vmatprep.subr.mxu0 0.0
    %1039 = vmatpush2.msra.mxu0 0.0
    %1040 = vmatprep.subr.mxu0 0.0
    %1041 = vmatpush2.msra.mxu0 0.0
    %1042 = vmatprep.mubr.f32.mxu0 0.0
    %1043 = vmatmul.mubr.f32.gmra.mxu0 %v976
    %v1044 = vpop.f32.mrf.mxu0
    %v1045 = vadd.f32 0.0, %v1044
    %v1046 = vpop.f32.mrf.mxu0
    %1047 = vdwg.mxu0
    %1048 = vrot.lane.b32.xlu0 %v456, 48
    %v1049 = vpop.permute.xlu0 %1048
    %v1052 = vsel %vm121, %v971, 0
    %1054 = vmatprep.subr.mxu0 0.0
    %1055 = vmatpush1.msra.mxu0 0.0
    %1056 = vmatprep.subr.mxu0 0.0
    %1057 = vmatpush1.msra.mxu0 0.0
    %1058 = vmatprep.subr.mxu0 0.0
    %1059 = vmatpush1.msra.mxu0 0.0
    %1060 = vmatprep.subr.mxu0 0.0
    %1061 = vmatpush1.msra.mxu0 0.0
    %1062 = vmatprep.subr.mxu0 0.0
    %1063 = vmatpush1.msra.mxu0 0.0
    %1064 = vmatprep.subr.mxu0 0.0
    %1065 = vmatpush1.msra.mxu0 0.0
    %1066 = vmatprep.subr.mxu0 0.0
    %1067 = vmatpush1.msra.mxu0 0.0
    %1068 = vmatprep.subr.mxu0 0.0
    %1069 = vmatpush1.msra.mxu0 0.0
    %1070 = vmatprep.subr.mxu0 0.0
    %1071 = vmatpush1.msra.mxu0 0.0
    %1072 = vmatprep.subr.mxu0 0.0
    %1073 = vmatpush1.msra.mxu0 0.0
    %1074 = vmatprep.subr.mxu0 0.0
    %1075 = vmatpush1.msra.mxu0 0.0
    %1076 = vmatprep.subr.mxu0 0.0
    %1077 = vmatpush1.msra.mxu0 0.0
    %1078 = vmatprep.subr.mxu0 0.0
    %1079 = vmatpush1.msra.mxu0 0.0
    %1080 = vmatprep.subr.mxu0 0.0
    %1081 = vmatpush1.msra.mxu0 0.0
    %1082 = vmatprep.subr.mxu0 0.0
    %1083 = vmatpush1.msra.mxu0 0.0
    %1084 = vmatprep.subr.mxu0 0.0
    %1085 = vmatpush1.msra.mxu0 %v1049
    %1086 = vmatprep.subr.mxu0 0.0
    %1087 = vmatpush2.msra.mxu0 0.0
    %1088 = vmatprep.subr.mxu0 0.0
    %1089 = vmatpush2.msra.mxu0 0.0
    %1090 = vmatprep.subr.mxu0 0.0
    %1091 = vmatpush2.msra.mxu0 0.0
    %1092 = vmatprep.subr.mxu0 0.0
    %1093 = vmatpush2.msra.mxu0 0.0
    %1094 = vmatprep.subr.mxu0 0.0
    %1095 = vmatpush2.msra.mxu0 0.0
    %1096 = vmatprep.subr.mxu0 0.0
    %1097 = vmatpush2.msra.mxu0 0.0
    %1098 = vmatprep.subr.mxu0 0.0
    %1099 = vmatpush2.msra.mxu0 0.0
    %1100 = vmatprep.subr.mxu0 0.0
    %1101 = vmatpush2.msra.mxu0 0.0
    %1102 = vmatprep.subr.mxu0 0.0
    %1103 = vmatpush2.msra.mxu0 0.0
    %1104 = vmatprep.subr.mxu0 0.0
    %1105 = vmatpush2.msra.mxu0 0.0
    %1106 = vmatprep.subr.mxu0 0.0
    %1107 = vmatpush2.msra.mxu0 0.0
    %1108 = vmatprep.subr.mxu0 0.0
    %1109 = vmatpush2.msra.mxu0 0.0
    %1110 = vmatprep.subr.mxu0 0.0
    %1111 = vmatpush2.msra.mxu0 0.0
    %1112 = vmatprep.subr.mxu0 0.0
    %1113 = vmatpush2.msra.mxu0 0.0
    %1114 = vmatprep.subr.mxu0 0.0
    %1115 = vmatpush2.msra.mxu0 0.0
    %1116 = vmatprep.subr.mxu0 0.0
    %1117 = vmatpush2.msra.mxu0 0.0
    %1118 = vmatprep.mubr.f32.mxu0 0.0
    %1119 = vmatmul.mubr.f32.gmra.mxu0 %v1052
    %v1120 = vpop.f32.mrf.mxu0
    %v1121 = vadd.f32 0.0, %v1120
    %v1122 = vpop.f32.mrf.mxu0
    %1123 = vdwg.mxu0
    %1126 = vrot.lane.b32.xlu0 %v1045, 16
    %v1127 = vpop.permute.xlu0 %1126
    %1128 = vrot.lane.b32.xlu0 %v1121, 16
    %v1129 = vpop.permute.xlu0 %1128
    %vm1132 = vcmask 261248
    %1133 = vst.msk [vmem:[#allocation2] sm:$0xff] %vm1132, %v1127
    %1134 = vst.msk [vmem:[#allocation2 + $0x8] sm:$0xff] %vm1132, %v1129
    %v1135 = vld [vmem:[#allocation2] sm:$0xff]
    %v1136 = vld [vmem:[#allocation2 + $0x8] sm:$0xff]
    %v1137 = vld [vmem:[#allocation12] sm:$0xff]
    %v1138 = vld [vmem:[#allocation12 + $0x8] sm:$0xff]
    %v1139 = vld [vmem:[#allocation12 + $0x10] sm:$0xff]
    %v1140 = vld [vmem:[#allocation12 + $0x18] sm:$0xff]
    %v1141 = vld [vmem:[%s8] sm:$0x1]
    %v1143 = vlaneseq
    %v1144 = vshrl.u32 %v1143, 7
    %v1145 = vsub.s32 0, %v1144
    %v1146 = vrot.slane %v1141, %v1145
    %v1149 = vsel %vm279, %v1135, 0
    %v1152 = vsel %vm279, %v1136, 0
    %1154 = vmatprep.subr.mxu0 0.0
    %1155 = vmatpush1.msra.mxu0 0.0
    %1156 = vmatprep.subr.mxu0 0.0
    %1157 = vmatpush1.msra.mxu0 0.0
    %1158 = vmatprep.subr.mxu0 0.0
    %1159 = vmatpush1.msra.mxu0 0.0
    %1160 = vmatprep.subr.mxu0 0.0
    %1161 = vmatpush1.msra.mxu0 0.0
    %1162 = vmatprep.subr.mxu0 0.0
    %1163 = vmatpush1.msra.mxu0 0.0
    %1164 = vmatprep.subr.mxu0 0.0
    %1165 = vmatpush1.msra.mxu0 0.0
    %1166 = vmatprep.subr.mxu0 0.0
    %1167 = vmatpush1.msra.mxu0 0.0
    %1168 = vmatprep.subr.mxu0 0.0
    %1169 = vmatpush1.msra.mxu0 0.0
    %1170 = vmatprep.subr.mxu0 0.0
    %1171 = vmatpush1.msra.mxu0 0.0
    %1172 = vmatprep.subr.mxu0 0.0
    %1173 = vmatpush1.msra.mxu0 0.0
    %1174 = vmatprep.subr.mxu0 0.0
    %1175 = vmatpush1.msra.mxu0 0.0
    %1176 = vmatprep.subr.mxu0 0.0
    %1177 = vmatpush1.msra.mxu0 0.0
    %1178 = vmatprep.subr.mxu0 0.0
    %1179 = vmatpush1.msra.mxu0 %v1140
    %1180 = vmatprep.subr.mxu0 0.0
    %1181 = vmatpush1.msra.mxu0 %v1139
    %1182 = vmatprep.subr.mxu0 0.0
    %1183 = vmatpush1.msra.mxu0 %v1138
    %1184 = vmatprep.subr.mxu0 0.0
    %1185 = vmatpush1.msra.mxu0 %v1137
    %1186 = vmatprep.subr.mxu0 0.0
    %1187 = vmatpush2.msra.mxu0 0.0
    %1188 = vmatprep.subr.mxu0 0.0
    %1189 = vmatpush2.msra.mxu0 0.0
    %1190 = vmatprep.subr.mxu0 0.0
    %1191 = vmatpush2.msra.mxu0 0.0
    %1192 = vmatprep.subr.mxu0 0.0
    %1193 = vmatpush2.msra.mxu0 0.0
    %1194 = vmatprep.subr.mxu0 0.0
    %1195 = vmatpush2.msra.mxu0 0.0
    %1196 = vmatprep.subr.mxu0 0.0
    %1197 = vmatpush2.msra.mxu0 0.0
    %1198 = vmatprep.subr.mxu0 0.0
    %1199 = vmatpush2.msra.mxu0 0.0
    %1200 = vmatprep.subr.mxu0 0.0
    %1201 = vmatpush2.msra.mxu0 0.0
    %1202 = vmatprep.subr.mxu0 0.0
    %1203 = vmatpush2.msra.mxu0 0.0
    %1204 = vmatprep.subr.mxu0 0.0
    %1205 = vmatpush2.msra.mxu0 0.0
    %1206 = vmatprep.subr.mxu0 0.0
    %1207 = vmatpush2.msra.mxu0 0.0
    %1208 = vmatprep.subr.mxu0 0.0
    %1209 = vmatpush2.msra.mxu0 0.0
    %1210 = vmatprep.subr.mxu0 0.0
    %1211 = vmatpush2.msra.mxu0 0.0
    %1212 = vmatprep.subr.mxu0 0.0
    %1213 = vmatpush2.msra.mxu0 0.0
    %1214 = vmatprep.subr.mxu0 0.0
    %1215 = vmatpush2.msra.mxu0 0.0
    %1216 = vmatprep.subr.mxu0 0.0
    %1217 = vmatpush2.msra.mxu0 0.0
    %1218 = vmatprep.mubr.f32.mxu0 0.0
    %1219 = vmatmul.mubr.f32.gmra.mxu0 %v1149
    %v1220 = vpop.f32.mrf.mxu0
    %v1221 = vadd.f32 %v1146, %v1220
    %v1222 = vpop.f32.mrf.mxu0
    %1223 = vmatprep.mubr.f32.mxu0 0.0
    %1224 = vmatmul.mubr.f32.gmra.mxu0 %v1152
    %v1225 = vpop.f32.mrf.mxu0
    %v1226 = vadd.f32 %v1146, %v1225
    %v1227 = vpop.f32.mrf.mxu0
    %1228 = vdwg.mxu0
    %v1229 = vsel %vm279, %v1221, 0.0
    %v1230 = vrot.slane %v1229, 4
    %v1231 = vadd.f32 %v1229, %v1230
    %v1232 = vrot.slane %v1231, 2
    %v1233 = vadd.f32 %v1231, %v1232
    %v1234 = vrot.slane %v1233, 1
    %v1235 = vadd.f32 %v1233, %v1234
    %v1236 = vsel %vm279, %v1226, 0.0
    %v1237 = vrot.slane %v1236, 4
    %v1238 = vadd.f32 %v1236, %v1237
    %v1239 = vrot.slane %v1238, 2
    %v1240 = vadd.f32 %v1238, %v1239
    %v1241 = vrot.slane %v1240, 1
    %v1242 = vadd.f32 %v1240, %v1241
    %v1243 = vrcp.pop 8.0
    %v1244 = vmul.f32 %v1235, %v1243
    %v1245 = vmul.f32 %v1242, %v1243
    %vm1248 = vcmask 1041409
    %v1249 = vsel %vm1248, %v1245, %v1244
    %vm1251 = vcmask 254976
    %1252 = vst.msk [vmem:[#allocation14] sm:$0x3] %vm1251, %v1249
    // Predicated region
    $region62: #{tpu_custom_call.1} parent=1 // pred_check
      _
    $region63: #{tpu_custom_call.1} parent=1 // pred_check_branch
      %1254 = sbr.rel (0) target = $region65
    $region64: #{tpu_custom_call.1} parent=1 // pred_region
      %s1256 = ssub.s32 32, 32
      %1257 = vsyncadd [#allocation5], %s1256
      %s1259 = sshll.u32 [#allocation14], 4
      %s1260 = int_to_ptr.vmem [resolvable:$true] %s1259
      %1262 = dma.vmem_to_hbm [thread:$0]  %s1260, 32, %s9, [#allocation5]
    $region65: #{tpu_custom_call.1} parent=1 // pred_fallthru
      _
    // Predicated region
    $region66: #{tpu_custom_call.1} parent=1 // pred_check
      _
    $region67: #{tpu_custom_call.1} parent=1 // pred_check_branch
      %1264 = sbr.rel (0) target = $region69
    $region68: #{tpu_custom_call.1} parent=1 // pred_region
      %1265 = dma.done [#allocation5], 32
    $region69: #{tpu_custom_call.1} parent=1 // pred_fallthru
      _
    %1266 = vsyncpa [#allocation4], 1
    %1267 = vsyncpa [#allocation7], 1
    %1268 = vsyncpa [#allocation10], 1
    %1269 = vsyncpa [#allocation13], 1
    %1270 = vsyncpa [#allocation5], 1

</llo_original>
